<compile_context>
chip_gen: v7x
topology: tpu7x:2x2x1
jax: 0.10.0
libtpu: 0.0.40
codegen_flags: <defaults>
</compile_context>

<pallas_src>
import functools

import jax
import jax.numpy as jnp
from jax.experimental import pallas as pl
from jax.experimental.pallas import tpu as pltpu


def _cdiv(a: int, b: int) -> int:
    return -(-a // b)


def _round_up(x: int, m: int) -> int:
    return _cdiv(x, m) * m


def _choose_tiling(B: int, block_b: int):
    """Pick (TB, B_pad) minimizing batch padding; >=2 (even) steps for large B."""
    n_steps = _cdiv(B, block_b)
    if B >= 256:  # compute-bound regime: make sure both v7x TensorCores get work
        if n_steps < 2:
            n_steps = 2
        elif n_steps % 2:
            n_steps += 1
    tb = _round_up(_cdiv(B, n_steps), 8)
    return tb, n_steps * tb


def apm_kernel(x_ref, w1_ref, b1_ref, w2_ref, b2_ref, w3_ref, b3_ref, o_ref):
    # Layer 1: Linear(in_pad, 512) + ReLU.  x already bf16 & lane-padded.
    h1 = jnp.dot(x_ref[...], w1_ref[...],
                 preferred_element_type=jnp.float32) + b1_ref[...]
    h1 = jnp.maximum(h1, 0.0)

    # Layer 2: Linear(512, 1024) + ReLU.
    h2 = jnp.dot(h1.astype(jnp.bfloat16), w2_ref[...],
                 preferred_element_type=jnp.float32) + b2_ref[...]
    h2 = jnp.maximum(h2, 0.0)

    # Layer 3: Linear(1024, out_pad).  Padded lanes carry b3 = -1e30 so they
    # contribute exp(...) == 0 to the softmax denominator.
    logits = jnp.dot(h2.astype(jnp.bfloat16), w3_ref[...],
                     preferred_element_type=jnp.float32) + b3_ref[...]

    # Softmax over the last dim (what F.softmax picks for a 2-D tensor).
    m = jnp.max(logits, axis=-1, keepdims=True)
    e = jnp.exp(logits - m)
    denom = jnp.sum(e, axis=-1, keepdims=True)
    o_ref[...] = (e / denom).astype(o_ref.dtype)   # exact divide: rows sum to 1


def apm_forward(x, params, out_dim, *, block_b=512):
    """x: (B, in_dim) f32.  params: bf16 weights (in,out) + f32 biases (1,out)."""
    w1, b1, w2, b2, w3, b3 = params
    B, in_dim = x.shape
    in_pad = w1.shape[0]
    out_pad = w3.shape[1]

    TB, B_pad = _choose_tiling(B, block_b)
    # Lane-dense bf16 activations: pad batch to B_pad, features to in_pad.
    xp = jnp.pad(x, ((0, B_pad - B), (0, in_pad - in_dim))).astype(jnp.bfloat16)

    grid = (B_pad // TB,)

    def const_spec(shape):
        return pl.BlockSpec(shape, lambda i: (0, 0))

    flops = 2 * B_pad * (in_pad * 512 + 512 * 1024 + 1024 * out_pad)
    bytes_accessed = int(
        xp.size * 2
        + sum(int(a.size) * a.dtype.itemsize for a in (w1, w2, w3, b1, b2, b3))
        + B_pad * out_pad * 4
    )
    cost = pl.CostEstimate(flops=int(flops),
                           transcendentals=int(B_pad * out_pad),
                           bytes_accessed=bytes_accessed)

    out_padded = pl.pallas_call(
        apm_kernel,
        out_shape=jax.ShapeDtypeStruct((B_pad, out_pad), jnp.float32),
        grid=grid,
        in_specs=[
            pl.BlockSpec((TB, in_pad), lambda i: (i, 0)),
            const_spec(w1.shape), const_spec(b1.shape),
            const_spec(w2.shape), const_spec(b2.shape),
            const_spec(w3.shape), const_spec(b3.shape),
        ],
        out_specs=pl.BlockSpec((TB, out_pad), lambda i: (i, 0)),
        compiler_params=pltpu.CompilerParams(
            dimension_semantics=("parallel",),
            vmem_limit_bytes=32 << 20,
        ),
        cost_estimate=cost,
    )(xp, w1, b1, w2, b2, w3, b3)

    return out_padded[:B, :out_dim]


def init_params(key, in_dim, out_dim):
    """PyTorch-style uniform(-1/sqrt(fan_in), +1/sqrt(fan_in)) init.

    Weights stored pre-transposed (in, out) in bf16.  w1 rows zero-padded to a
    lane-dense in_pad; last layer lane-padded to a multiple of 128 (zero weight
    columns, -1e30 bias lanes so padded logits never receive softmax mass).
    """
    ks = jax.random.split(key, 6)

    def lin(kw, kb, fan_in, fan_out):
        bound = 1.0 / jnp.sqrt(fan_in)
        w = jax.random.uniform(kw, (fan_in, fan_out), jnp.float32, -bound, bound)
        b = jax.random.uniform(kb, (1, fan_out), jnp.float32, -bound, bound)
        return w, b

    w1, b1 = lin(ks[0], ks[1], in_dim, 512)
    w2, b2 = lin(ks[2], ks[3], 512, 1024)
    w3, b3 = lin(ks[4], ks[5], 1024, out_dim)

    in_pad = max(_round_up(in_dim, 128), 128)
    out_pad = max(_round_up(out_dim, 128), 128)

    w1p = jnp.zeros((in_pad, 512), jnp.float32).at[:in_dim, :].set(w1)
    w3p = jnp.zeros((1024, out_pad), jnp.float32).at[:, :out_dim].set(w3)
    b3p = jnp.full((1, out_pad), -1e30, jnp.float32).at[:, :out_dim].set(b3)

    return (w1p.astype(jnp.bfloat16), b1,
            w2.astype(jnp.bfloat16), b2,
            w3p.astype(jnp.bfloat16), b3p)


def ref_forward(x, params, out_dim):
    """Plain-JAX reference with the same bf16-operand / f32-accumulate math."""
    w1, b1, w2, b2, w3, b3 = params
    in_pad = w1.shape[0]
    xp = jnp.pad(x, ((0, 0), (0, in_pad - x.shape[1]))).astype(jnp.bfloat16)
    h = jnp.dot(xp, w1, preferred_element_type=jnp.float32) + b1
    h = jnp.maximum(h, 0.0)
    h = jnp.dot(h.astype(jnp.bfloat16), w2, preferred_element_type=jnp.float32) + b2
    h = jnp.maximum(h, 0.0)
    logits = jnp.dot(h.astype(jnp.bfloat16), w3, preferred_element_type=jnp.float32) + b3
    return jax.nn.softmax(logits, axis=-1)[:, :out_dim]


if __name__ == "__main__":
    in_dim, out_dim, batch = 32, 16, 8
    key = jax.random.PRNGKey(0)
    k_x, k_p = jax.random.split(key)
    x = jax.random.normal(k_x, (batch, in_dim), jnp.float32)
    params = init_params(k_p, in_dim, out_dim)

    fwd = jax.jit(functools.partial(apm_forward, out_dim=out_dim))
    out = fwd(x, params)
    jax.block_until_ready(out)

    ref = ref_forward(x, params, out_dim)
    assert out.shape == (batch, out_dim)
    assert jnp.allclose(out, ref, atol=2e-3), "mismatch vs reference"
    assert jnp.allclose(out.sum(axis=-1), 1.0, atol=1e-3), "rows don't sum to 1"
    print("KERNEL_OK")
</pallas_src>

<mosaic_0001>
module attributes {stable_mosaic.version = 11 : i64} {
  func.func @apm_kernel(%arg0: i32, %arg1: memref<8x128xbf16, #tpu.memory_space<vmem>>, %arg2: memref<128x512xbf16, #tpu.memory_space<vmem>>, %arg3: memref<1x512xf32, #tpu.memory_space<vmem>>, %arg4: memref<512x1024xbf16, #tpu.memory_space<vmem>>, %arg5: memref<1x1024xf32, #tpu.memory_space<vmem>>, %arg6: memref<1024x128xbf16, #tpu.memory_space<vmem>>, %arg7: memref<1x128xf32, #tpu.memory_space<vmem>>, %arg8: memref<8x128xf32, #tpu.memory_space<vmem>>) attributes {dimension_semantics = [#tpu.dimension_semantics<parallel>], iteration_bounds = array<i64: 1>, scalar_prefetch = 0 : i64, scratch_operands = 0 : i64, tpu.core_type = #tpu.core_type<tc>, window_params = [{transform_indices = @transform_0, window_bounds = array<i64: 8, 128>}, {pipeline_mode = #tpu.pipeline_mode<synchronous>, transform_indices = @transform_1, window_bounds = array<i64: 128, 512>}, {pipeline_mode = #tpu.pipeline_mode<synchronous>, transform_indices = @transform_2, window_bounds = array<i64: 1, 512>}, {pipeline_mode = #tpu.pipeline_mode<synchronous>, transform_indices = @transform_3, window_bounds = array<i64: 512, 1024>}, {pipeline_mode = #tpu.pipeline_mode<synchronous>, transform_indices = @transform_4, window_bounds = array<i64: 1, 1024>}, {pipeline_mode = #tpu.pipeline_mode<synchronous>, transform_indices = @transform_5, window_bounds = array<i64: 1024, 128>}, {pipeline_mode = #tpu.pipeline_mode<synchronous>, transform_indices = @transform_6, window_bounds = array<i64: 1, 128>}, {transform_indices = @transform_7, window_bounds = array<i64: 8, 128>}]} {
    %c0 = arith.constant 0 : index
    %c0_0 = arith.constant 0 : index
    %0 = vector.load %arg1[%c0, %c0_0] : memref<8x128xbf16, #tpu.memory_space<vmem>>, vector<8x128xbf16>
    %c0_1 = arith.constant 0 : index
    %c0_2 = arith.constant 0 : index
    %1 = vector.load %arg2[%c0_1, %c0_2] : memref<128x512xbf16, #tpu.memory_space<vmem>>, vector<128x512xbf16>
    %cst = arith.constant dense<0.000000e+00> : vector<8x512xf32>
    %2 = tpu.matmul %0, %1, %cst {dimension_numbers = #tpu.dot_dimension_numbers<[1], [0], [0], [1], [0, 0, 1, 1], [], []>} : vector<8x128xbf16>, vector<128x512xbf16>, vector<8x512xf32> -> vector<8x512xf32>
    %c0_3 = arith.constant 0 : index
    %c0_4 = arith.constant 0 : index
    %3 = vector.load %arg3[%c0_3, %c0_4] : memref<1x512xf32, #tpu.memory_space<vmem>>, vector<1x512xf32>
    %4 = vector.broadcast %3 : vector<1x512xf32> to vector<8x512xf32>
    %5 = arith.addf %2, %4 : vector<8x512xf32>
    %cst_5 = arith.constant 0.000000e+00 : f32
    %6 = vector.broadcast %cst_5 : f32 to vector<8x512xf32>
    %7 = arith.maximumf %5, %6 : vector<8x512xf32>
    %8 = arith.truncf %7 : vector<8x512xf32> to vector<8x512xbf16>
    %c0_6 = arith.constant 0 : index
    %c0_7 = arith.constant 0 : index
    %9 = vector.load %arg4[%c0_6, %c0_7] : memref<512x1024xbf16, #tpu.memory_space<vmem>>, vector<512x1024xbf16>
    %cst_8 = arith.constant dense<0.000000e+00> : vector<8x1024xf32>
    %10 = tpu.matmul %8, %9, %cst_8 {dimension_numbers = #tpu.dot_dimension_numbers<[1], [0], [0], [1], [0, 0, 1, 1], [], []>} : vector<8x512xbf16>, vector<512x1024xbf16>, vector<8x1024xf32> -> vector<8x1024xf32>
    %c0_9 = arith.constant 0 : index
    %c0_10 = arith.constant 0 : index
    %11 = vector.load %arg5[%c0_9, %c0_10] : memref<1x1024xf32, #tpu.memory_space<vmem>>, vector<1x1024xf32>
    %12 = vector.broadcast %11 : vector<1x1024xf32> to vector<8x1024xf32>
    %13 = arith.addf %10, %12 : vector<8x1024xf32>
    %cst_11 = arith.constant 0.000000e+00 : f32
    %14 = vector.broadcast %cst_11 : f32 to vector<8x1024xf32>
    %15 = arith.maximumf %13, %14 : vector<8x1024xf32>
    %16 = arith.truncf %15 : vector<8x1024xf32> to vector<8x1024xbf16>
    %c0_12 = arith.constant 0 : index
    %c0_13 = arith.constant 0 : index
    %17 = vector.load %arg6[%c0_12, %c0_13] : memref<1024x128xbf16, #tpu.memory_space<vmem>>, vector<1024x128xbf16>
    %cst_14 = arith.constant dense<0.000000e+00> : vector<8x128xf32>
    %18 = tpu.matmul %16, %17, %cst_14 {dimension_numbers = #tpu.dot_dimension_numbers<[1], [0], [0], [1], [0, 0, 1, 1], [], []>} : vector<8x1024xbf16>, vector<1024x128xbf16>, vector<8x128xf32> -> vector<8x128xf32>
    %c0_15 = arith.constant 0 : index
    %c0_16 = arith.constant 0 : index
    %19 = vector.load %arg7[%c0_15, %c0_16] : memref<1x128xf32, #tpu.memory_space<vmem>>, vector<1x128xf32>
    %20 = vector.broadcast %19 : vector<1x128xf32> to vector<8x128xf32>
    %21 = arith.addf %18, %20 : vector<8x128xf32>
    %cst_17 = arith.constant dense<0xFF800000> : vector<8xf32>
    %22 = vector.multi_reduction <maximumf>, %21, %cst_17 [1] : vector<8x128xf32> to vector<8xf32>
    %23 = vector.shape_cast %22 : vector<8xf32> to vector<8x1xf32>
    %24 = vector.broadcast %23 : vector<8x1xf32> to vector<8x128xf32>
    %25 = arith.subf %21, %24 : vector<8x128xf32>
    %26 = math.exp %25 : vector<8x128xf32>
    %cst_18 = arith.constant dense<0.000000e+00> : vector<8xf32>
    %27 = vector.multi_reduction <add>, %26, %cst_18 [1] : vector<8x128xf32> to vector<8xf32>
    %28 = vector.shape_cast %27 : vector<8xf32> to vector<8x1xf32>
    %29 = vector.broadcast %28 : vector<8x1xf32> to vector<8x128xf32>
    %30 = arith.divf %26, %29 : vector<8x128xf32>
    %c0_19 = arith.constant 0 : index
    %c0_20 = arith.constant 0 : index
    %31 = vector.load %arg8[%c0_19, %c0_20] : memref<8x128xf32, #tpu.memory_space<vmem>>, vector<8x128xf32>
    tpu.vector_store %arg8[%c0_19, %c0_20], %30 {strides = array<i32>} : memref<8x128xf32, #tpu.memory_space<vmem>>, vector<8x128xf32>,
    return
  }
  func.func @transform_0(%arg0: i32) -> (i32, i32) {
    %c0_i32 = arith.constant 0 : i32
    %c0_i32_0 = arith.constant 0 : i32
    return %arg0, %c0_i32 : i32, i32
  }
  func.func @transform_1(%arg0: i32) -> (i32, i32) {
    %c0_i32 = arith.constant 0 : i32
    %c0_i32_0 = arith.constant 0 : i32
    %c0_i32_1 = arith.constant 0 : i32
    return %c0_i32, %c0_i32_0 : i32, i32
  }
  func.func @transform_2(%arg0: i32) -> (i32, i32) {
    %c0_i32 = arith.constant 0 : i32
    %c0_i32_0 = arith.constant 0 : i32
    %c0_i32_1 = arith.constant 0 : i32
    return %c0_i32, %c0_i32_0 : i32, i32
  }
  func.func @transform_3(%arg0: i32) -> (i32, i32) {
    %c0_i32 = arith.constant 0 : i32
    %c0_i32_0 = arith.constant 0 : i32
    %c0_i32_1 = arith.constant 0 : i32
    return %c0_i32, %c0_i32_0 : i32, i32
  }
  func.func @transform_4(%arg0: i32) -> (i32, i32) {
    %c0_i32 = arith.constant 0 : i32
    %c0_i32_0 = arith.constant 0 : i32
    %c0_i32_1 = arith.constant 0 : i32
    return %c0_i32, %c0_i32_0 : i32, i32
  }
  func.func @transform_5(%arg0: i32) -> (i32, i32) {
    %c0_i32 = arith.constant 0 : i32
    %c0_i32_0 = arith.constant 0 : i32
    %c0_i32_1 = arith.constant 0 : i32
    return %c0_i32, %c0_i32_0 : i32, i32
  }
  func.func @transform_6(%arg0: i32) -> (i32, i32) {
    %c0_i32 = arith.constant 0 : i32
    %c0_i32_0 = arith.constant 0 : i32
    %c0_i32_1 = arith.constant 0 : i32
    return %c0_i32, %c0_i32_0 : i32, i32
  }
  func.func @transform_7(%arg0: i32) -> (i32, i32) {
    %c0_i32 = arith.constant 0 : i32
    %c0_i32_0 = arith.constant 0 : i32
    return %arg0, %c0_i32 : i32, i32
  }
}

</mosaic_0001>

<llo_original>
// kernel: apm_forward.1
$region0: #{apm_forward.1}
  #allocation0 [shape = 'u32[]', space=smem, size = 0x4, offset = 0x4, fixed_abs, tag = 'smem constant byte address 0x4 - core index']
  #allocation1 [shape = 'u32[144,128]{1,0:T(1,128)}', space=vmem, size = 0x12000, scoped, tag = 'internal scratch']
  %s0 = inlined_call_operand.vmem [shape: bf16[8,128], index: 0, kind: input, shape index: {}]
  %s1 = inlined_call_operand.hbm [shape: bf16[128,512], index: 1, kind: input, shape index: {}]
  %s2 = inlined_call_operand.vmem [shape: f32[1,512], index: 2, kind: input, shape index: {}]
  %s3 = inlined_call_operand.hbm [shape: bf16[512,1024], index: 3, kind: input, shape index: {}]
  %s4 = inlined_call_operand.vmem [shape: f32[1,1024], index: 4, kind: input, shape index: {}]
  %s5 = inlined_call_operand.hbm [shape: bf16[1024,128], index: 5, kind: input, shape index: {}]
  %s6 = inlined_call_operand.vmem [shape: f32[1,128], index: 6, kind: input, shape index: {}]
  %s7 = inlined_call_operand.hbm [shape: f32[8,128], index: 7, kind: output, shape index: {}]
  %s8 = sld [smem:[#allocation0]]
  $region50: #{apm_forward.1} parent=0
    _
  %s10 = ssub.s32 1, %s8
  %s11 = scalar_select 0, %s10, %s8
  $region1: #{apm_forward.1} parent=0
    #allocation2 [shape = 'u8[131072]{0}', space=vmem, size = 0x20000, scoped, tag = 'input window, operand 1, single buffered']
    #allocation3 [shape = 's32[1]{0}', space=sflag, size = 0x4, scoped, tag = 'scoped memory for apm_forward.1']
    #allocation4 [shape = 's32[1]{0}', space=sflag, size = 0x4, scoped, tag = 'scoped memory for apm_forward.1']
    #allocation5 [shape = 'u8[1048576]{0}', space=vmem, size = 0x100000, scoped, tag = 'input window, operand 3, single buffered']
    #allocation6 [shape = 's32[1]{0}', space=sflag, size = 0x4, scoped, tag = 'scoped memory for apm_forward.1']
    #allocation7 [shape = 'u8[262144]{0}', space=vmem, size = 0x40000, scoped, tag = 'input window, operand 5, single buffered']
    #allocation8 [shape = 'u8[4096]{0}', space=vmem, size = 0x1000, scoped, tag = 'output window, operand 0, single buffered']
    %12 = vsyncpa [#allocation3], 0
    %13 = vsyncpa [#allocation6], 0
    %14 = vsyncpa [#allocation4], 0
    // Predicated region
    $region2: #{apm_forward.1} parent=1 // pred_check
      _
    $region3: #{apm_forward.1} parent=1 // pred_check_branch
      %16 = sbr.rel (0) target = $region5
    $region4: #{apm_forward.1} parent=1 // pred_region
      _
    $region5: #{apm_forward.1} parent=1 // pred_fallthru
      _
    // Predicated region
    $region6: #{apm_forward.1} parent=1 // pred_check
      _
    $region7: #{apm_forward.1} parent=1 // pred_check_branch
      %18 = sbr.rel (0) target = $region9
    $region8: #{apm_forward.1} parent=1 // pred_region
      %s20 = ssub.s32 4096, 4096
      %21 = vsyncadd [#allocation3], %s20
      %s22 = sshll.u32 [#allocation2], 4
      %s23 = int_to_ptr.vmem [resolvable:$true] %s22
      %28 = dma.hbm_to_vmem [thread:$0]  %s1, 4096, %s23, [#allocation3], 256, 256, 16
    $region9: #{apm_forward.1} parent=1 // pred_fallthru
      _
    // Predicated region
    $region10: #{apm_forward.1} parent=1 // pred_check
      _
    $region11: #{apm_forward.1} parent=1 // pred_check_branch
      %30 = sbr.rel (0) target = $region13
    $region12: #{apm_forward.1} parent=1 // pred_region
      _
    $region13: #{apm_forward.1} parent=1 // pred_fallthru
      _
    // Predicated region
    $region14: #{apm_forward.1} parent=1 // pred_check
      _
    $region15: #{apm_forward.1} parent=1 // pred_check_branch
      %32 = sbr.rel (0) target = $region17
    $region16: #{apm_forward.1} parent=1 // pred_region
      %s34 = ssub.s32 32768, 32768
      %35 = vsyncadd [#allocation6], %s34
      %s36 = sshll.u32 [#allocation5], 4
      %s37 = int_to_ptr.vmem [resolvable:$true] %s36
      %42 = dma.hbm_to_vmem [thread:$0]  %s3, 32768, %s37, [#allocation6], 512, 512, 32
    $region17: #{apm_forward.1} parent=1 // pred_fallthru
      _
    // Predicated region
    $region18: #{apm_forward.1} parent=1 // pred_check
      _
    $region19: #{apm_forward.1} parent=1 // pred_check_branch
      %44 = sbr.rel (0) target = $region21
    $region20: #{apm_forward.1} parent=1 // pred_region
      _
    $region21: #{apm_forward.1} parent=1 // pred_fallthru
      _
    // Predicated region
    $region22: #{apm_forward.1} parent=1 // pred_check
      _
    $region23: #{apm_forward.1} parent=1 // pred_check_branch
      %46 = sbr.rel (0) target = $region25
    $region24: #{apm_forward.1} parent=1 // pred_region
      %s48 = ssub.s32 8192, 8192
      %49 = vsyncadd [#allocation6], %s48
      %s50 = sshll.u32 [#allocation7], 4
      %s51 = int_to_ptr.vmem [resolvable:$true] %s50
      %56 = dma.hbm_to_vmem [thread:$0]  %s5, 8192, %s51, [#allocation6], 64, 64, 4
    $region25: #{apm_forward.1} parent=1 // pred_fallthru
      _
    // Predicated region
    $region26: #{apm_forward.1} parent=1 // pred_check
      _
    $region27: #{apm_forward.1} parent=1 // pred_check_branch
      %58 = sbr.rel (0) target = $region29
    $region28: #{apm_forward.1} parent=1 // pred_region
      _
    $region29: #{apm_forward.1} parent=1 // pred_fallthru
      _
    // Predicated region
    $region30: #{apm_forward.1} parent=1 // pred_check
      _
    $region31: #{apm_forward.1} parent=1 // pred_check_branch
      %60 = sbr.rel (0) target = $region33
    $region32: #{apm_forward.1} parent=1 // pred_region
      %61 = dma.done [#allocation3], 4096
    $region33: #{apm_forward.1} parent=1 // pred_fallthru
      _
    // Predicated region
    $region34: #{apm_forward.1} parent=1 // pred_check
      _
    $region35: #{apm_forward.1} parent=1 // pred_check_branch
      %63 = sbr.rel (0) target = $region37
    $region36: #{apm_forward.1} parent=1 // pred_region
      %64 = dma.done [#allocation6], 32768
    $region37: #{apm_forward.1} parent=1 // pred_fallthru
      _
    // Predicated region
    $region38: #{apm_forward.1} parent=1 // pred_check
      _
    $region39: #{apm_forward.1} parent=1 // pred_check_branch
      %66 = sbr.rel (0) target = $region41
    $region40: #{apm_forward.1} parent=1 // pred_region
      %67 = dma.done [#allocation6], 8192
    $region41: #{apm_forward.1} parent=1 // pred_fallthru
      _
    %v69 = vld [vmem:[%s0] sm:$0xf]
    %v70 = vld [vmem:[#allocation2] sm:$0xff]
    %v71 = vld [vmem:[#allocation2 + $0x8] sm:$0xff]
    %v72 = vld [vmem:[#allocation2 + $0x10] sm:$0xff]
    %v73 = vld [vmem:[#allocation2 + $0x18] sm:$0xff]
    %v74 = vld [vmem:[#allocation2 + $0x20] sm:$0xff]
    %v75 = vld [vmem:[#allocation2 + $0x28] sm:$0xff]
    %v76 = vld [vmem:[#allocation2 + $0x30] sm:$0xff]
    %v77 = vld [vmem:[#allocation2 + $0x38] sm:$0xff]
    %v78 = vld [vmem:[#allocation2 + $0x40] sm:$0xff]
    %v79 = vld [vmem:[#allocation2 + $0x48] sm:$0xff]
    %v80 = vld [vmem:[#allocation2 + $0x50] sm:$0xff]
    %v81 = vld [vmem:[#allocation2 + $0x58] sm:$0xff]
    %v82 = vld [vmem:[#allocation2 + $0x60] sm:$0xff]
    %v83 = vld [vmem:[#allocation2 + $0x68] sm:$0xff]
    %v84 = vld [vmem:[#allocation2 + $0x70] sm:$0xff]
    %v85 = vld [vmem:[#allocation2 + $0x78] sm:$0xff]
    %v86 = vld [vmem:[#allocation2 + $0x80] sm:$0xff]
    %v87 = vld [vmem:[#allocation2 + $0x88] sm:$0xff]
    %v88 = vld [vmem:[#allocation2 + $0x90] sm:$0xff]
    %v89 = vld [vmem:[#allocation2 + $0x98] sm:$0xff]
    %v90 = vld [vmem:[#allocation2 + $0xa0] sm:$0xff]
    %v91 = vld [vmem:[#allocation2 + $0xa8] sm:$0xff]
    %v92 = vld [vmem:[#allocation2 + $0xb0] sm:$0xff]
    %v93 = vld [vmem:[#allocation2 + $0xb8] sm:$0xff]
    %v94 = vld [vmem:[#allocation2 + $0xc0] sm:$0xff]
    %v95 = vld [vmem:[#allocation2 + $0xc8] sm:$0xff]
    %v96 = vld [vmem:[#allocation2 + $0xd0] sm:$0xff]
    %v97 = vld [vmem:[#allocation2 + $0xd8] sm:$0xff]
    %v98 = vld [vmem:[#allocation2 + $0xe0] sm:$0xff]
    %v99 = vld [vmem:[#allocation2 + $0xe8] sm:$0xff]
    %v100 = vld [vmem:[#allocation2 + $0xf0] sm:$0xff]
    %v101 = vld [vmem:[#allocation2 + $0xf8] sm:$0xff]
    %v102 = vld [vmem:[%s2] sm:$0xf]
    %v104 = vlaneseq
    %v105 = vshrl.u32 %v104, 7
    %v106 = vsub.s32 0, %v105
    %v107 = vrot.slane %v102, %v106
    %v108 = vlaneseq
    %v109 = vshrl.u32 %v108, 7
    %v110 = vsub.s32 1, %v109
    %v111 = vrot.slane %v102, %v110
    %v112 = vlaneseq
    %v113 = vshrl.u32 %v112, 7
    %v114 = vsub.s32 2, %v113
    %v115 = vrot.slane %v102, %v114
    %v116 = vlaneseq
    %v117 = vshrl.u32 %v116, 7
    %v118 = vsub.s32 3, %v117
    %v119 = vrot.slane %v102, %v118
    %v156 = vunpack.c.l.b16 %v70
    %v157 = vunpack.c.h.b16 %v70
    %v158 = vunpack.c.l.b16 %v71
    %v159 = vunpack.c.h.b16 %v71
    %v160 = vunpack.c.l.b16 %v72
    %v161 = vunpack.c.h.b16 %v72
    %v162 = vunpack.c.l.b16 %v73
    %v163 = vunpack.c.h.b16 %v73
    %v164 = vunpack.c.l.b16 %v74
    %v165 = vunpack.c.h.b16 %v74
    %v166 = vunpack.c.l.b16 %v75
    %v167 = vunpack.c.h.b16 %v75
    %v168 = vunpack.c.l.b16 %v76
    %v169 = vunpack.c.h.b16 %v76
    %v170 = vunpack.c.l.b16 %v77
    %v171 = vunpack.c.h.b16 %v77
    %v172 = vunpack.c.l.b16 %v78
    %v173 = vunpack.c.h.b16 %v78
    %v174 = vunpack.c.l.b16 %v79
    %v175 = vunpack.c.h.b16 %v79
    %v176 = vunpack.c.l.b16 %v80
    %v177 = vunpack.c.h.b16 %v80
    %v178 = vunpack.c.l.b16 %v81
    %v179 = vunpack.c.h.b16 %v81
    %v180 = vunpack.c.l.b16 %v82
    %v181 = vunpack.c.h.b16 %v82
    %v182 = vunpack.c.l.b16 %v83
    %v183 = vunpack.c.h.b16 %v83
    %v184 = vunpack.c.l.b16 %v84
    %v185 = vunpack.c.h.b16 %v84
    %v186 = vunpack.c.l.b16 %v85
    %v187 = vunpack.c.h.b16 %v85
    %v188 = vunpack.c.l.b16 %v86
    %v189 = vunpack.c.h.b16 %v86
    %v190 = vunpack.c.l.b16 %v87
    %v191 = vunpack.c.h.b16 %v87
    %v192 = vunpack.c.l.b16 %v88
    %v193 = vunpack.c.h.b16 %v88
    %v194 = vunpack.c.l.b16 %v89
    %v195 = vunpack.c.h.b16 %v89
    %v196 = vunpack.c.l.b16 %v90
    %v197 = vunpack.c.h.b16 %v90
    %v198 = vunpack.c.l.b16 %v91
    %v199 = vunpack.c.h.b16 %v91
    %v200 = vunpack.c.l.b16 %v92
    %v201 = vunpack.c.h.b16 %v92
    %v202 = vunpack.c.l.b16 %v93
    %v203 = vunpack.c.h.b16 %v93
    %v204 = vunpack.c.l.b16 %v94
    %v205 = vunpack.c.h.b16 %v94
    %v206 = vunpack.c.l.b16 %v95
    %v207 = vunpack.c.h.b16 %v95
    %v208 = vunpack.c.l.b16 %v96
    %v209 = vunpack.c.h.b16 %v96
    %v210 = vunpack.c.l.b16 %v97
    %v211 = vunpack.c.h.b16 %v97
    %v212 = vunpack.c.l.b16 %v98
    %v213 = vunpack.c.h.b16 %v98
    %v214 = vunpack.c.l.b16 %v99
    %v215 = vunpack.c.h.b16 %v99
    %v216 = vunpack.c.l.b16 %v100
    %v217 = vunpack.c.h.b16 %v100
    %v218 = vunpack.c.l.b16 %v101
    %v219 = vunpack.c.h.b16 %v101
    %v220 = vpack.c.b16 %v160, %v156
    %v221 = vpack.c.b16 %v161, %v157
    %v222 = vpack.c.b16 %v162, %v158
    %v223 = vpack.c.b16 %v163, %v159
    %v224 = vpack.c.b16 %v168, %v164
    %v225 = vpack.c.b16 %v169, %v165
    %v226 = vpack.c.b16 %v170, %v166
    %v227 = vpack.c.b16 %v171, %v167
    %v228 = vpack.c.b16 %v176, %v172
    %v229 = vpack.c.b16 %v177, %v173
    %v230 = vpack.c.b16 %v178, %v174
    %v231 = vpack.c.b16 %v179, %v175
    %v232 = vpack.c.b16 %v184, %v180
    %v233 = vpack.c.b16 %v185, %v181
    %v234 = vpack.c.b16 %v186, %v182
    %v235 = vpack.c.b16 %v187, %v183
    %v236 = vpack.c.b16 %v192, %v188
    %v237 = vpack.c.b16 %v193, %v189
    %v238 = vpack.c.b16 %v194, %v190
    %v239 = vpack.c.b16 %v195, %v191
    %v240 = vpack.c.b16 %v200, %v196
    %v241 = vpack.c.b16 %v201, %v197
    %v242 = vpack.c.b16 %v202, %v198
    %v243 = vpack.c.b16 %v203, %v199
    %v244 = vpack.c.b16 %v208, %v204
    %v245 = vpack.c.b16 %v209, %v205
    %v246 = vpack.c.b16 %v210, %v206
    %v247 = vpack.c.b16 %v211, %v207
    %v248 = vpack.c.b16 %v216, %v212
    %v249 = vpack.c.b16 %v217, %v213
    %v250 = vpack.c.b16 %v218, %v214
    %v251 = vpack.c.b16 %v219, %v215
    %284 = vmatprep.subr.bf16.mxu0 %v221
    %285 = vmatpush1.bf16.msra.mxu0 %v220
    %286 = vmatprep.subr.bf16.mxu0 %v225
    %287 = vmatpush1.bf16.msra.mxu0 %v224
    %288 = vmatprep.subr.bf16.mxu0 %v229
    %289 = vmatpush1.bf16.msra.mxu0 %v228
    %290 = vmatprep.subr.bf16.mxu0 %v233
    %291 = vmatpush1.bf16.msra.mxu0 %v232
    %292 = vmatprep.subr.bf16.mxu0 %v237
    %293 = vmatpush1.bf16.msra.mxu0 %v236
    %294 = vmatprep.subr.bf16.mxu0 %v241
    %295 = vmatpush1.bf16.msra.mxu0 %v240
    %296 = vmatprep.subr.bf16.mxu0 %v245
    %297 = vmatpush1.bf16.msra.mxu0 %v244
    %298 = vmatprep.subr.bf16.mxu0 %v249
    %299 = vmatpush1.bf16.msra.mxu0 %v248
    %300 = vmatprep.subr.bf16.mxu0 0
    %301 = vmatpush1.bf16.msra.mxu0 0
    %302 = vmatprep.subr.bf16.mxu0 0
    %303 = vmatpush1.bf16.msra.mxu0 0
    %304 = vmatprep.subr.bf16.mxu0 0
    %305 = vmatpush1.bf16.msra.mxu0 0
    %306 = vmatprep.subr.bf16.mxu0 0
    %307 = vmatpush1.bf16.msra.mxu0 0
    %308 = vmatprep.subr.bf16.mxu0 0
    %309 = vmatpush1.bf16.msra.mxu0 0
    %310 = vmatprep.subr.bf16.mxu0 0
    %311 = vmatpush1.bf16.msra.mxu0 0
    %312 = vmatprep.subr.bf16.mxu0 0
    %313 = vmatpush1.bf16.msra.mxu0 0
    %314 = vmatprep.subr.bf16.mxu0 0
    %315 = vmatpush1.bf16.msra.mxu0 0
    %316 = vmatprep.mubr.bf16.mxu0 0
    %317 = vmatmul.mubr.bf16.gmra.mrb[0].mxu0 %v69
    %v318 = vpop.f32.mrb[0].mxu0
    %v319 = vadd.f32 %v107, %v318
    %v320 = vpop.f32.mrb[0].mxu0
    %v321 = vadd.f32 %v111, %v320
    %v322 = vpop.f32.mrb[0].mxu0
    %v323 = vpop.f32.mrb[0].mxu0
    %324 = vdwg.mxu0
    %325 = vmatprep.subr.bf16.mxu0 %v223
    %326 = vmatpush1.bf16.msra.mxu0 %v222
    %327 = vmatprep.subr.bf16.mxu0 %v227
    %328 = vmatpush1.bf16.msra.mxu0 %v226
    %329 = vmatprep.subr.bf16.mxu0 %v231
    %330 = vmatpush1.bf16.msra.mxu0 %v230
    %331 = vmatprep.subr.bf16.mxu0 %v235
    %332 = vmatpush1.bf16.msra.mxu0 %v234
    %333 = vmatprep.subr.bf16.mxu0 %v239
    %334 = vmatpush1.bf16.msra.mxu0 %v238
    %335 = vmatprep.subr.bf16.mxu0 %v243
    %336 = vmatpush1.bf16.msra.mxu0 %v242
    %337 = vmatprep.subr.bf16.mxu0 %v247
    %338 = vmatpush1.bf16.msra.mxu0 %v246
    %339 = vmatprep.subr.bf16.mxu0 %v251
    %340 = vmatpush1.bf16.msra.mxu0 %v250
    %341 = vmatprep.subr.bf16.mxu0 0
    %342 = vmatpush1.bf16.msra.mxu0 0
    %343 = vmatprep.subr.bf16.mxu0 0
    %344 = vmatpush1.bf16.msra.mxu0 0
    %345 = vmatprep.subr.bf16.mxu0 0
    %346 = vmatpush1.bf16.msra.mxu0 0
    %347 = vmatprep.subr.bf16.mxu0 0
    %348 = vmatpush1.bf16.msra.mxu0 0
    %349 = vmatprep.subr.bf16.mxu0 0
    %350 = vmatpush1.bf16.msra.mxu0 0
    %351 = vmatprep.subr.bf16.mxu0 0
    %352 = vmatpush1.bf16.msra.mxu0 0
    %353 = vmatprep.subr.bf16.mxu0 0
    %354 = vmatpush1.bf16.msra.mxu0 0
    %355 = vmatprep.subr.bf16.mxu0 0
    %356 = vmatpush1.bf16.msra.mxu0 0
    %357 = vmatprep.mubr.bf16.mxu0 0
    %358 = vmatmul.mubr.bf16.gmra.mrb[0].mxu0 %v69
    %v359 = vpop.f32.mrb[0].mxu0
    %v360 = vadd.f32 %v115, %v359
    %v361 = vpop.f32.mrb[0].mxu0
    %v362 = vadd.f32 %v119, %v361
    %v363 = vpop.f32.mrb[0].mxu0
    %v364 = vpop.f32.mrb[0].mxu0
    %365 = vdwg.mxu0
    %v366 = vmax.f32 %v319, 0.0
    %v367 = vmax.f32 %v321, 0.0
    %v368 = vmax.f32 %v360, 0.0
    %v369 = vmax.f32 %v362, 0.0
    %v370 = vpack.c.bf16 %v366, %v366
    %v371 = vpack.c.bf16 %v367, %v367
    %v372 = vpack.c.bf16 %v368, %v368
    %v373 = vpack.c.bf16 %v369, %v369
    %v374 = vld [vmem:[#allocation5] sm:$0xff]
    %v375 = vld [vmem:[#allocation5 + $0x8] sm:$0xff]
    %v376 = vld [vmem:[#allocation5 + $0x10] sm:$0xff]
    %v377 = vld [vmem:[#allocation5 + $0x18] sm:$0xff]
    %v378 = vld [vmem:[#allocation5 + $0x20] sm:$0xff]
    %v379 = vld [vmem:[#allocation5 + $0x28] sm:$0xff]
    %v380 = vld [vmem:[#allocation5 + $0x30] sm:$0xff]
    %v381 = vld [vmem:[#allocation5 + $0x38] sm:$0xff]
    %v382 = vld [vmem:[#allocation5 + $0x40] sm:$0xff]
    %v383 = vld [vmem:[#allocation5 + $0x48] sm:$0xff]
    %v384 = vld [vmem:[#allocation5 + $0x50] sm:$0xff]
    %v385 = vld [vmem:[#allocation5 + $0x58] sm:$0xff]
    %v386 = vld [vmem:[#allocation5 + $0x60] sm:$0xff]
    %v387 = vld [vmem:[#allocation5 + $0x68] sm:$0xff]
    %v388 = vld [vmem:[#allocation5 + $0x70] sm:$0xff]
    %v389 = vld [vmem:[#allocation5 + $0x78] sm:$0xff]
    %v390 = vld [vmem:[#allocation5 + $0x80] sm:$0xff]
    %v391 = vld [vmem:[#allocation5 + $0x88] sm:$0xff]
    %v392 = vld [vmem:[#allocation5 + $0x90] sm:$0xff]
    %v393 = vld [vmem:[#allocation5 + $0x98] sm:$0xff]
    %v394 = vld [vmem:[#allocation5 + $0xa0] sm:$0xff]
    %v395 = vld [vmem:[#allocation5 + $0xa8] sm:$0xff]
    %v396 = vld [vmem:[#allocation5 + $0xb0] sm:$0xff]
    %v397 = vld [vmem:[#allocation5 + $0xb8] sm:$0xff]
    %v398 = vld [vmem:[#allocation5 + $0xc0] sm:$0xff]
    %v399 = vld [vmem:[#allocation5 + $0xc8] sm:$0xff]
    %v400 = vld [vmem:[#allocation5 + $0xd0] sm:$0xff]
    %v401 = vld [vmem:[#allocation5 + $0xd8] sm:$0xff]
    %v402 = vld [vmem:[#allocation5 + $0xe0] sm:$0xff]
    %v403 = vld [vmem:[#allocation5 + $0xe8] sm:$0xff]
    %v404 = vld [vmem:[#allocation5 + $0xf0] sm:$0xff]
    %v405 = vld [vmem:[#allocation5 + $0xf8] sm:$0xff]
    %v406 = vld [vmem:[#allocation5 + $0x100] sm:$0xff]
    %v407 = vld [vmem:[#allocation5 + $0x108] sm:$0xff]
    %v408 = vld [vmem:[#allocation5 + $0x110] sm:$0xff]
    %v409 = vld [vmem:[#allocation5 + $0x118] sm:$0xff]
    %v410 = vld [vmem:[#allocation5 + $0x120] sm:$0xff]
    %v411 = vld [vmem:[#allocation5 + $0x128] sm:$0xff]
    %v412 = vld [vmem:[#allocation5 + $0x130] sm:$0xff]
    %v413 = vld [vmem:[#allocation5 + $0x138] sm:$0xff]
    %v414 = vld [vmem:[#allocation5 + $0x140] sm:$0xff]
    %v415 = vld [vmem:[#allocation5 + $0x148] sm:$0xff]
    %v416 = vld [vmem:[#allocation5 + $0x150] sm:$0xff]
    %v417 = vld [vmem:[#allocation5 + $0x158] sm:$0xff]
    %v418 = vld [vmem:[#allocation5 + $0x160] sm:$0xff]
    %v419 = vld [vmem:[#allocation5 + $0x168] sm:$0xff]
    %v420 = vld [vmem:[#allocation5 + $0x170] sm:$0xff]
    %v421 = vld [vmem:[#allocation5 + $0x178] sm:$0xff]
    %v422 = vld [vmem:[#allocation5 + $0x180] sm:$0xff]
    %v423 = vld [vmem:[#allocation5 + $0x188] sm:$0xff]
    %v424 = vld [vmem:[#allocation5 + $0x190] sm:$0xff]
    %v425 = vld [vmem:[#allocation5 + $0x198] sm:$0xff]
    %v426 = vld [vmem:[#allocation5 + $0x1a0] sm:$0xff]
    %v427 = vld [vmem:[#allocation5 + $0x1a8] sm:$0xff]
    %v428 = vld [vmem:[#allocation5 + $0x1b0] sm:$0xff]
    %v429 = vld [vmem:[#allocation5 + $0x1b8] sm:$0xff]
    %v430 = vld [vmem:[#allocation5 + $0x1c0] sm:$0xff]
    %v431 = vld [vmem:[#allocation5 + $0x1c8] sm:$0xff]
    %v432 = vld [vmem:[#allocation5 + $0x1d0] sm:$0xff]
    %v433 = vld [vmem:[#allocation5 + $0x1d8] sm:$0xff]
    %v434 = vld [vmem:[#allocation5 + $0x1e0] sm:$0xff]
    %v435 = vld [vmem:[#allocation5 + $0x1e8] sm:$0xff]
    %v436 = vld [vmem:[#allocation5 + $0x1f0] sm:$0xff]
    %v437 = vld [vmem:[#allocation5 + $0x1f8] sm:$0xff]
    %v438 = vld [vmem:[#allocation5 + $0x200] sm:$0xff]
    %v439 = vld [vmem:[#allocation5 + $0x208] sm:$0xff]
    %v440 = vld [vmem:[#allocation5 + $0x210] sm:$0xff]
    %v441 = vld [vmem:[#allocation5 + $0x218] sm:$0xff]
    %v442 = vld [vmem:[#allocation5 + $0x220] sm:$0xff]
    %v443 = vld [vmem:[#allocation5 + $0x228] sm:$0xff]
    %v444 = vld [vmem:[#allocation5 + $0x230] sm:$0xff]
    %v445 = vld [vmem:[#allocation5 + $0x238] sm:$0xff]
    %v446 = vld [vmem:[#allocation5 + $0x240] sm:$0xff]
    %v447 = vld [vmem:[#allocation5 + $0x248] sm:$0xff]
    %v448 = vld [vmem:[#allocation5 + $0x250] sm:$0xff]
    %v449 = vld [vmem:[#allocation5 + $0x258] sm:$0xff]
    %v450 = vld [vmem:[#allocation5 + $0x260] sm:$0xff]
    %v451 = vld [vmem:[#allocation5 + $0x268] sm:$0xff]
    %v452 = vld [vmem:[#allocation5 + $0x270] sm:$0xff]
    %v453 = vld [vmem:[#allocation5 + $0x278] sm:$0xff]
    %v454 = vld [vmem:[#allocation5 + $0x280] sm:$0xff]
    %v455 = vld [vmem:[#allocation5 + $0x288] sm:$0xff]
    %v456 = vld [vmem:[#allocation5 + $0x290] sm:$0xff]
    %v457 = vld [vmem:[#allocation5 + $0x298] sm:$0xff]
    %v458 = vld [vmem:[#allocation5 + $0x2a0] sm:$0xff]
    %v459 = vld [vmem:[#allocation5 + $0x2a8] sm:$0xff]
    %v460 = vld [vmem:[#allocation5 + $0x2b0] sm:$0xff]
    %v461 = vld [vmem:[#allocation5 + $0x2b8] sm:$0xff]
    %v462 = vld [vmem:[#allocation5 + $0x2c0] sm:$0xff]
    %v463 = vld [vmem:[#allocation5 + $0x2c8] sm:$0xff]
    %v464 = vld [vmem:[#allocation5 + $0x2d0] sm:$0xff]
    %v465 = vld [vmem:[#allocation5 + $0x2d8] sm:$0xff]
    %v466 = vld [vmem:[#allocation5 + $0x2e0] sm:$0xff]
    %v467 = vld [vmem:[#allocation5 + $0x2e8] sm:$0xff]
    %v468 = vld [vmem:[#allocation5 + $0x2f0] sm:$0xff]
    %v469 = vld [vmem:[#allocation5 + $0x2f8] sm:$0xff]
    %v470 = vld [vmem:[#allocation5 + $0x300] sm:$0xff]
    %v471 = vld [vmem:[#allocation5 + $0x308] sm:$0xff]
    %v472 = vld [vmem:[#allocation5 + $0x310] sm:$0xff]
    %v473 = vld [vmem:[#allocation5 + $0x318] sm:$0xff]
    %v474 = vld [vmem:[#allocation5 + $0x320] sm:$0xff]
    %v475 = vld [vmem:[#allocation5 + $0x328] sm:$0xff]
    %v476 = vld [vmem:[#allocation5 + $0x330] sm:$0xff]
    %v477 = vld [vmem:[#allocation5 + $0x338] sm:$0xff]
    %v478 = vld [vmem:[#allocation5 + $0x340] sm:$0xff]
    %v479 = vld [vmem:[#allocation5 + $0x348] sm:$0xff]
    %v480 = vld [vmem:[#allocation5 + $0x350] sm:$0xff]
    %v481 = vld [vmem:[#allocation5 + $0x358] sm:$0xff]
    %v482 = vld [vmem:[#allocation5 + $0x360] sm:$0xff]
    %v483 = vld [vmem:[#allocation5 + $0x368] sm:$0xff]
    %v484 = vld [vmem:[#allocation5 + $0x370] sm:$0xff]
    %v485 = vld [vmem:[#allocation5 + $0x378] sm:$0xff]
    %v486 = vld [vmem:[#allocation5 + $0x380] sm:$0xff]
    %v487 = vld [vmem:[#allocation5 + $0x388] sm:$0xff]
    %v488 = vld [vmem:[#allocation5 + $0x390] sm:$0xff]
    %v489 = vld [vmem:[#allocation5 + $0x398] sm:$0xff]
    %v490 = vld [vmem:[#allocation5 + $0x3a0] sm:$0xff]
    %v491 = vld [vmem:[#allocation5 + $0x3a8] sm:$0xff]
    %v492 = vld [vmem:[#allocation5 + $0x3b0] sm:$0xff]
    %v493 = vld [vmem:[#allocation5 + $0x3b8] sm:$0xff]
    %v494 = vld [vmem:[#allocation5 + $0x3c0] sm:$0xff]
    %v495 = vld [vmem:[#allocation5 + $0x3c8] sm:$0xff]
    %v496 = vld [vmem:[#allocation5 + $0x3d0] sm:$0xff]
    %v497 = vld [vmem:[#allocation5 + $0x3d8] sm:$0xff]
    %v498 = vld [vmem:[#allocation5 + $0x3e0] sm:$0xff]
    %v499 = vld [vmem:[#allocation5 + $0x3e8] sm:$0xff]
    %v500 = vld [vmem:[#allocation5 + $0x3f0] sm:$0xff]
    %v501 = vld [vmem:[#allocation5 + $0x3f8] sm:$0xff]
    %v502 = vld [vmem:[#allocation5 + $0x400] sm:$0xff]
    %v503 = vld [vmem:[#allocation5 + $0x408] sm:$0xff]
    %v504 = vld [vmem:[#allocation5 + $0x410] sm:$0xff]
    %v505 = vld [vmem:[#allocation5 + $0x418] sm:$0xff]
    %v506 = vld [vmem:[#allocation5 + $0x420] sm:$0xff]
    %v507 = vld [vmem:[#allocation5 + $0x428] sm:$0xff]
    %v508 = vld [vmem:[#allocation5 + $0x430] sm:$0xff]
    %v509 = vld [vmem:[#allocation5 + $0x438] sm:$0xff]
    %v510 = vld [vmem:[#allocation5 + $0x440] sm:$0xff]
    %v511 = vld [vmem:[#allocation5 + $0x448] sm:$0xff]
    %v512 = vld [vmem:[#allocation5 + $0x450] sm:$0xff]
    %v513 = vld [vmem:[#allocation5 + $0x458] sm:$0xff]
    %v514 = vld [vmem:[#allocation5 + $0x460] sm:$0xff]
    %v515 = vld [vmem:[#allocation5 + $0x468] sm:$0xff]
    %v516 = vld [vmem:[#allocation5 + $0x470] sm:$0xff]
    %v517 = vld [vmem:[#allocation5 + $0x478] sm:$0xff]
    %v518 = vld [vmem:[#allocation5 + $0x480] sm:$0xff]
    %v519 = vld [vmem:[#allocation5 + $0x488] sm:$0xff]
    %v520 = vld [vmem:[#allocation5 + $0x490] sm:$0xff]
    %v521 = vld [vmem:[#allocation5 + $0x498] sm:$0xff]
    %v522 = vld [vmem:[#allocation5 + $0x4a0] sm:$0xff]
    %v523 = vld [vmem:[#allocation5 + $0x4a8] sm:$0xff]
    %v524 = vld [vmem:[#allocation5 + $0x4b0] sm:$0xff]
    %v525 = vld [vmem:[#allocation5 + $0x4b8] sm:$0xff]
    %v526 = vld [vmem:[#allocation5 + $0x4c0] sm:$0xff]
    %v527 = vld [vmem:[#allocation5 + $0x4c8] sm:$0xff]
    %v528 = vld [vmem:[#allocation5 + $0x4d0] sm:$0xff]
    %v529 = vld [vmem:[#allocation5 + $0x4d8] sm:$0xff]
    %v530 = vld [vmem:[#allocation5 + $0x4e0] sm:$0xff]
    %v531 = vld [vmem:[#allocation5 + $0x4e8] sm:$0xff]
    %v532 = vld [vmem:[#allocation5 + $0x4f0] sm:$0xff]
    %v533 = vld [vmem:[#allocation5 + $0x4f8] sm:$0xff]
    %v534 = vld [vmem:[#allocation5 + $0x500] sm:$0xff]
    %v535 = vld [vmem:[#allocation5 + $0x508] sm:$0xff]
    %v536 = vld [vmem:[#allocation5 + $0x510] sm:$0xff]
    %v537 = vld [vmem:[#allocation5 + $0x518] sm:$0xff]
    %v538 = vld [vmem:[#allocation5 + $0x520] sm:$0xff]
    %v539 = vld [vmem:[#allocation5 + $0x528] sm:$0xff]
    %v540 = vld [vmem:[#allocation5 + $0x530] sm:$0xff]
    %v541 = vld [vmem:[#allocation5 + $0x538] sm:$0xff]
    %v542 = vld [vmem:[#allocation5 + $0x540] sm:$0xff]
    %v543 = vld [vmem:[#allocation5 + $0x548] sm:$0xff]
    %v544 = vld [vmem:[#allocation5 + $0x550] sm:$0xff]
    %v545 = vld [vmem:[#allocation5 + $0x558] sm:$0xff]
    %v546 = vld [vmem:[#allocation5 + $0x560] sm:$0xff]
    %v547 = vld [vmem:[#allocation5 + $0x568] sm:$0xff]
    %v548 = vld [vmem:[#allocation5 + $0x570] sm:$0xff]
    %v549 = vld [vmem:[#allocation5 + $0x578] sm:$0xff]
    %v550 = vld [vmem:[#allocation5 + $0x580] sm:$0xff]
    %v551 = vld [vmem:[#allocation5 + $0x588] sm:$0xff]
    %v552 = vld [vmem:[#allocation5 + $0x590] sm:$0xff]
    %v553 = vld [vmem:[#allocation5 + $0x598] sm:$0xff]
    %v554 = vld [vmem:[#allocation5 + $0x5a0] sm:$0xff]
    %v555 = vld [vmem:[#allocation5 + $0x5a8] sm:$0xff]
    %v556 = vld [vmem:[#allocation5 + $0x5b0] sm:$0xff]
    %v557 = vld [vmem:[#allocation5 + $0x5b8] sm:$0xff]
    %v558 = vld [vmem:[#allocation5 + $0x5c0] sm:$0xff]
    %v559 = vld [vmem:[#allocation5 + $0x5c8] sm:$0xff]
    %v560 = vld [vmem:[#allocation5 + $0x5d0] sm:$0xff]
    %v561 = vld [vmem:[#allocation5 + $0x5d8] sm:$0xff]
    %v562 = vld [vmem:[#allocation5 + $0x5e0] sm:$0xff]
    %v563 = vld [vmem:[#allocation5 + $0x5e8] sm:$0xff]
    %v564 = vld [vmem:[#allocation5 + $0x5f0] sm:$0xff]
    %v565 = vld [vmem:[#allocation5 + $0x5f8] sm:$0xff]
    %v566 = vld [vmem:[#allocation5 + $0x600] sm:$0xff]
    %v567 = vld [vmem:[#allocation5 + $0x608] sm:$0xff]
    %v568 = vld [vmem:[#allocation5 + $0x610] sm:$0xff]
    %v569 = vld [vmem:[#allocation5 + $0x618] sm:$0xff]
    %v570 = vld [vmem:[#allocation5 + $0x620] sm:$0xff]
    %v571 = vld [vmem:[#allocation5 + $0x628] sm:$0xff]
    %v572 = vld [vmem:[#allocation5 + $0x630] sm:$0xff]
    %v573 = vld [vmem:[#allocation5 + $0x638] sm:$0xff]
    %v574 = vld [vmem:[#allocation5 + $0x640] sm:$0xff]
    %v575 = vld [vmem:[#allocation5 + $0x648] sm:$0xff]
    %v576 = vld [vmem:[#allocation5 + $0x650] sm:$0xff]
    %v577 = vld [vmem:[#allocation5 + $0x658] sm:$0xff]
    %v578 = vld [vmem:[#allocation5 + $0x660] sm:$0xff]
    %v579 = vld [vmem:[#allocation5 + $0x668] sm:$0xff]
    %v580 = vld [vmem:[#allocation5 + $0x670] sm:$0xff]
    %v581 = vld [vmem:[#allocation5 + $0x678] sm:$0xff]
    %v582 = vld [vmem:[#allocation5 + $0x680] sm:$0xff]
    %v583 = vld [vmem:[#allocation5 + $0x688] sm:$0xff]
    %v584 = vld [vmem:[#allocation5 + $0x690] sm:$0xff]
    %v585 = vld [vmem:[#allocation5 + $0x698] sm:$0xff]
    %v586 = vld [vmem:[#allocation5 + $0x6a0] sm:$0xff]
    %v587 = vld [vmem:[#allocation5 + $0x6a8] sm:$0xff]
    %v588 = vld [vmem:[#allocation5 + $0x6b0] sm:$0xff]
    %v589 = vld [vmem:[#allocation5 + $0x6b8] sm:$0xff]
    %v590 = vld [vmem:[#allocation5 + $0x6c0] sm:$0xff]
    %v591 = vld [vmem:[#allocation5 + $0x6c8] sm:$0xff]
    %v592 = vld [vmem:[#allocation5 + $0x6d0] sm:$0xff]
    %v593 = vld [vmem:[#allocation5 + $0x6d8] sm:$0xff]
    %v594 = vld [vmem:[#allocation5 + $0x6e0] sm:$0xff]
    %v595 = vld [vmem:[#allocation5 + $0x6e8] sm:$0xff]
    %v596 = vld [vmem:[#allocation5 + $0x6f0] sm:$0xff]
    %v597 = vld [vmem:[#allocation5 + $0x6f8] sm:$0xff]
    %v598 = vld [vmem:[#allocation5 + $0x700] sm:$0xff]
    %v599 = vld [vmem:[#allocation5 + $0x708] sm:$0xff]
    %v600 = vld [vmem:[#allocation5 + $0x710] sm:$0xff]
    %v601 = vld [vmem:[#allocation5 + $0x718] sm:$0xff]
    %v602 = vld [vmem:[#allocation5 + $0x720] sm:$0xff]
    %v603 = vld [vmem:[#allocation5 + $0x728] sm:$0xff]
    %v604 = vld [vmem:[#allocation5 + $0x730] sm:$0xff]
    %v605 = vld [vmem:[#allocation5 + $0x738] sm:$0xff]
    %v606 = vld [vmem:[#allocation5 + $0x740] sm:$0xff]
    %v607 = vld [vmem:[#allocation5 + $0x748] sm:$0xff]
    %v608 = vld [vmem:[#allocation5 + $0x750] sm:$0xff]
    %v609 = vld [vmem:[#allocation5 + $0x758] sm:$0xff]
    %v610 = vld [vmem:[#allocation5 + $0x760] sm:$0xff]
    %v611 = vld [vmem:[#allocation5 + $0x768] sm:$0xff]
    %v612 = vld [vmem:[#allocation5 + $0x770] sm:$0xff]
    %v613 = vld [vmem:[#allocation5 + $0x778] sm:$0xff]
    %v614 = vld [vmem:[#allocation5 + $0x780] sm:$0xff]
    %v615 = vld [vmem:[#allocation5 + $0x788] sm:$0xff]
    %v616 = vld [vmem:[#allocation5 + $0x790] sm:$0xff]
    %v617 = vld [vmem:[#allocation5 + $0x798] sm:$0xff]
    %v618 = vld [vmem:[#allocation5 + $0x7a0] sm:$0xff]
    %v619 = vld [vmem:[#allocation5 + $0x7a8] sm:$0xff]
    %v620 = vld [vmem:[#allocation5 + $0x7b0] sm:$0xff]
    %v621 = vld [vmem:[#allocation5 + $0x7b8] sm:$0xff]
    %v622 = vld [vmem:[#allocation5 + $0x7c0] sm:$0xff]
    %v623 = vld [vmem:[#allocation5 + $0x7c8] sm:$0xff]
    %v624 = vld [vmem:[#allocation5 + $0x7d0] sm:$0xff]
    %v625 = vld [vmem:[#allocation5 + $0x7d8] sm:$0xff]
    %v626 = vld [vmem:[#allocation5 + $0x7e0] sm:$0xff]
    %v627 = vld [vmem:[#allocation5 + $0x7e8] sm:$0xff]
    %v628 = vld [vmem:[#allocation5 + $0x7f0] sm:$0xff]
    %v629 = vld [vmem:[#allocation5 + $0x7f8] sm:$0xff]
    %v630 = vld [vmem:[%s4] sm:$0xff]
    %v632 = vlaneseq
    %v633 = vshrl.u32 %v632, 7
    %v634 = vsub.s32 0, %v633
    %v635 = vrot.slane %v630, %v634
    %v636 = vlaneseq
    %v637 = vshrl.u32 %v636, 7
    %v638 = vsub.s32 1, %v637
    %v639 = vrot.slane %v630, %v638
    %v640 = vlaneseq
    %v641 = vshrl.u32 %v640, 7
    %v642 = vsub.s32 2, %v641
    %v643 = vrot.slane %v630, %v642
    %v644 = vlaneseq
    %v645 = vshrl.u32 %v644, 7
    %v646 = vsub.s32 3, %v645
    %v647 = vrot.slane %v630, %v646
    %v648 = vlaneseq
    %v649 = vshrl.u32 %v648, 7
    %v650 = vsub.s32 4, %v649
    %v651 = vrot.slane %v630, %v650
    %v652 = vlaneseq
    %v653 = vshrl.u32 %v652, 7
    %v654 = vsub.s32 5, %v653
    %v655 = vrot.slane %v630, %v654
    %v656 = vlaneseq
    %v657 = vshrl.u32 %v656, 7
    %v658 = vsub.s32 6, %v657
    %v659 = vrot.slane %v630, %v658
    %v660 = vlaneseq
    %v661 = vshrl.u32 %v660, 7
    %v662 = vsub.s32 7, %v661
    %v663 = vrot.slane %v630, %v662
    %v928 = vunpack.c.l.b16 %v374
    %v929 = vunpack.c.h.b16 %v374
    %v930 = vunpack.c.l.b16 %v375
    %v931 = vunpack.c.h.b16 %v375
    %v932 = vunpack.c.l.b16 %v376
    %v933 = vunpack.c.h.b16 %v376
    %v934 = vunpack.c.l.b16 %v377
    %v935 = vunpack.c.h.b16 %v377
    %v936 = vunpack.c.l.b16 %v378
    %v937 = vunpack.c.h.b16 %v378
    %v938 = vunpack.c.l.b16 %v379
    %v939 = vunpack.c.h.b16 %v379
    %v940 = vunpack.c.l.b16 %v380
    %v941 = vunpack.c.h.b16 %v380
    %v942 = vunpack.c.l.b16 %v381
    %v943 = vunpack.c.h.b16 %v381
    %v944 = vunpack.c.l.b16 %v382
    %v945 = vunpack.c.h.b16 %v382
    %v946 = vunpack.c.l.b16 %v383
    %v947 = vunpack.c.h.b16 %v383
    %v948 = vunpack.c.l.b16 %v384
    %v949 = vunpack.c.h.b16 %v384
    %v950 = vunpack.c.l.b16 %v385
    %v951 = vunpack.c.h.b16 %v385
    %v952 = vunpack.c.l.b16 %v386
    %v953 = vunpack.c.h.b16 %v386
    %v954 = vunpack.c.l.b16 %v387
    %v955 = vunpack.c.h.b16 %v387
    %v956 = vunpack.c.l.b16 %v388
    %v957 = vunpack.c.h.b16 %v388
    %v958 = vunpack.c.l.b16 %v389
    %v959 = vunpack.c.h.b16 %v389
    %v960 = vunpack.c.l.b16 %v390
    %v961 = vunpack.c.h.b16 %v390
    %v962 = vunpack.c.l.b16 %v391
    %v963 = vunpack.c.h.b16 %v391
    %v964 = vunpack.c.l.b16 %v392
    %v965 = vunpack.c.h.b16 %v392
    %v966 = vunpack.c.l.b16 %v393
    %v967 = vunpack.c.h.b16 %v393
    %v968 = vunpack.c.l.b16 %v394
    %v969 = vunpack.c.h.b16 %v394
    %v970 = vunpack.c.l.b16 %v395
    %v971 = vunpack.c.h.b16 %v395
    %v972 = vunpack.c.l.b16 %v396
    %v973 = vunpack.c.h.b16 %v396
    %v974 = vunpack.c.l.b16 %v397
    %v975 = vunpack.c.h.b16 %v397
    %v976 = vunpack.c.l.b16 %v398
    %v977 = vunpack.c.h.b16 %v398
    %v978 = vunpack.c.l.b16 %v399
    %v979 = vunpack.c.h.b16 %v399
    %v980 = vunpack.c.l.b16 %v400
    %v981 = vunpack.c.h.b16 %v400
    %v982 = vunpack.c.l.b16 %v401
    %v983 = vunpack.c.h.b16 %v401
    %v984 = vunpack.c.l.b16 %v402
    %v985 = vunpack.c.h.b16 %v402
    %v986 = vunpack.c.l.b16 %v403
    %v987 = vunpack.c.h.b16 %v403
    %v988 = vunpack.c.l.b16 %v404
    %v989 = vunpack.c.h.b16 %v404
    %v990 = vunpack.c.l.b16 %v405
    %v991 = vunpack.c.h.b16 %v405
    %v992 = vunpack.c.l.b16 %v406
    %v993 = vunpack.c.h.b16 %v406
    %v994 = vunpack.c.l.b16 %v407
    %v995 = vunpack.c.h.b16 %v407
    %v996 = vunpack.c.l.b16 %v408
    %v997 = vunpack.c.h.b16 %v408
    %v998 = vunpack.c.l.b16 %v409
    %v999 = vunpack.c.h.b16 %v409
    %v1000 = vunpack.c.l.b16 %v410
    %v1001 = vunpack.c.h.b16 %v410
    %v1002 = vunpack.c.l.b16 %v411
    %v1003 = vunpack.c.h.b16 %v411
    %v1004 = vunpack.c.l.b16 %v412
    %v1005 = vunpack.c.h.b16 %v412
    %v1006 = vunpack.c.l.b16 %v413
    %v1007 = vunpack.c.h.b16 %v413
    %v1008 = vunpack.c.l.b16 %v414
    %v1009 = vunpack.c.h.b16 %v414
    %v1010 = vunpack.c.l.b16 %v415
    %v1011 = vunpack.c.h.b16 %v415
    %v1012 = vunpack.c.l.b16 %v416
    %v1013 = vunpack.c.h.b16 %v416
    %v1014 = vunpack.c.l.b16 %v417
    %v1015 = vunpack.c.h.b16 %v417
    %v1016 = vunpack.c.l.b16 %v418
    %v1017 = vunpack.c.h.b16 %v418
    %v1018 = vunpack.c.l.b16 %v419
    %v1019 = vunpack.c.h.b16 %v419
    %v1020 = vunpack.c.l.b16 %v420
    %v1021 = vunpack.c.h.b16 %v420
    %v1022 = vunpack.c.l.b16 %v421
    %v1023 = vunpack.c.h.b16 %v421
    %v1024 = vunpack.c.l.b16 %v422
    %v1025 = vunpack.c.h.b16 %v422
    %v1026 = vunpack.c.l.b16 %v423
    %v1027 = vunpack.c.h.b16 %v423
    %v1028 = vunpack.c.l.b16 %v424
    %v1029 = vunpack.c.h.b16 %v424
    %v1030 = vunpack.c.l.b16 %v425
    %v1031 = vunpack.c.h.b16 %v425
    %v1032 = vunpack.c.l.b16 %v426
    %v1033 = vunpack.c.h.b16 %v426
    %v1034 = vunpack.c.l.b16 %v427
    %v1035 = vunpack.c.h.b16 %v427
    %v1036 = vunpack.c.l.b16 %v428
    %v1037 = vunpack.c.h.b16 %v428
    %v1038 = vunpack.c.l.b16 %v429
    %v1039 = vunpack.c.h.b16 %v429
    %v1040 = vunpack.c.l.b16 %v430
    %v1041 = vunpack.c.h.b16 %v430
    %v1042 = vunpack.c.l.b16 %v431
    %v1043 = vunpack.c.h.b16 %v431
    %v1044 = vunpack.c.l.b16 %v432
    %v1045 = vunpack.c.h.b16 %v432
    %v1046 = vunpack.c.l.b16 %v433
    %v1047 = vunpack.c.h.b16 %v433
    %v1048 = vunpack.c.l.b16 %v434
    %v1049 = vunpack.c.h.b16 %v434
    %v1050 = vunpack.c.l.b16 %v435
    %v1051 = vunpack.c.h.b16 %v435
    %v1052 = vunpack.c.l.b16 %v436
    %v1053 = vunpack.c.h.b16 %v436
    %v1054 = vunpack.c.l.b16 %v437
    %v1055 = vunpack.c.h.b16 %v437
    %v1056 = vunpack.c.l.b16 %v438
    %v1057 = vunpack.c.h.b16 %v438
    %v1058 = vunpack.c.l.b16 %v439
    %v1059 = vunpack.c.h.b16 %v439
    %v1060 = vunpack.c.l.b16 %v440
    %v1061 = vunpack.c.h.b16 %v440
    %v1062 = vunpack.c.l.b16 %v441
    %v1063 = vunpack.c.h.b16 %v441
    %v1064 = vunpack.c.l.b16 %v442
    %v1065 = vunpack.c.h.b16 %v442
    %v1066 = vunpack.c.l.b16 %v443
    %v1067 = vunpack.c.h.b16 %v443
    %v1068 = vunpack.c.l.b16 %v444
    %v1069 = vunpack.c.h.b16 %v444
    %v1070 = vunpack.c.l.b16 %v445
    %v1071 = vunpack.c.h.b16 %v445
    %v1072 = vunpack.c.l.b16 %v446
    %v1073 = vunpack.c.h.b16 %v446
    %v1074 = vunpack.c.l.b16 %v447
    %v1075 = vunpack.c.h.b16 %v447
    %v1076 = vunpack.c.l.b16 %v448
    %v1077 = vunpack.c.h.b16 %v448
    %v1078 = vunpack.c.l.b16 %v449
    %v1079 = vunpack.c.h.b16 %v449
    %v1080 = vunpack.c.l.b16 %v450
    %v1081 = vunpack.c.h.b16 %v450
    %v1082 = vunpack.c.l.b16 %v451
    %v1083 = vunpack.c.h.b16 %v451
    %v1084 = vunpack.c.l.b16 %v452
    %v1085 = vunpack.c.h.b16 %v452
    %v1086 = vunpack.c.l.b16 %v453
    %v1087 = vunpack.c.h.b16 %v453
    %v1088 = vunpack.c.l.b16 %v454
    %v1089 = vunpack.c.h.b16 %v454
    %v1090 = vunpack.c.l.b16 %v455
    %v1091 = vunpack.c.h.b16 %v455
    %v1092 = vunpack.c.l.b16 %v456
    %v1093 = vunpack.c.h.b16 %v456
    %v1094 = vunpack.c.l.b16 %v457
    %v1095 = vunpack.c.h.b16 %v457
    %v1096 = vunpack.c.l.b16 %v458
    %v1097 = vunpack.c.h.b16 %v458
    %v1098 = vunpack.c.l.b16 %v459
    %v1099 = vunpack.c.h.b16 %v459
    %v1100 = vunpack.c.l.b16 %v460
    %v1101 = vunpack.c.h.b16 %v460
    %v1102 = vunpack.c.l.b16 %v461
    %v1103 = vunpack.c.h.b16 %v461
    %v1104 = vunpack.c.l.b16 %v462
    %v1105 = vunpack.c.h.b16 %v462
    %v1106 = vunpack.c.l.b16 %v463
    %v1107 = vunpack.c.h.b16 %v463
    %v1108 = vunpack.c.l.b16 %v464
    %v1109 = vunpack.c.h.b16 %v464
    %v1110 = vunpack.c.l.b16 %v465
    %v1111 = vunpack.c.h.b16 %v465
    %v1112 = vunpack.c.l.b16 %v466
    %v1113 = vunpack.c.h.b16 %v466
    %v1114 = vunpack.c.l.b16 %v467
    %v1115 = vunpack.c.h.b16 %v467
    %v1116 = vunpack.c.l.b16 %v468
    %v1117 = vunpack.c.h.b16 %v468
    %v1118 = vunpack.c.l.b16 %v469
    %v1119 = vunpack.c.h.b16 %v469
    %v1120 = vunpack.c.l.b16 %v470
    %v1121 = vunpack.c.h.b16 %v470
    %v1122 = vunpack.c.l.b16 %v471
    %v1123 = vunpack.c.h.b16 %v471
    %v1124 = vunpack.c.l.b16 %v472
    %v1125 = vunpack.c.h.b16 %v472
    %v1126 = vunpack.c.l.b16 %v473
    %v1127 = vunpack.c.h.b16 %v473
    %v1128 = vunpack.c.l.b16 %v474
    %v1129 = vunpack.c.h.b16 %v474
    %v1130 = vunpack.c.l.b16 %v475
    %v1131 = vunpack.c.h.b16 %v475
    %v1132 = vunpack.c.l.b16 %v476
    %v1133 = vunpack.c.h.b16 %v476
    %v1134 = vunpack.c.l.b16 %v477
    %v1135 = vunpack.c.h.b16 %v477
    %v1136 = vunpack.c.l.b16 %v478
    %v1137 = vunpack.c.h.b16 %v478
    %v1138 = vunpack.c.l.b16 %v479
    %v1139 = vunpack.c.h.b16 %v479
    %v1140 = vunpack.c.l.b16 %v480
    %v1141 = vunpack.c.h.b16 %v480
    %v1142 = vunpack.c.l.b16 %v481
    %v1143 = vunpack.c.h.b16 %v481
    %v1144 = vunpack.c.l.b16 %v482
    %v1145 = vunpack.c.h.b16 %v482
    %v1146 = vunpack.c.l.b16 %v483
    %v1147 = vunpack.c.h.b16 %v483
    %v1148 = vunpack.c.l.b16 %v484
    %v1149 = vunpack.c.h.b16 %v484
    %v1150 = vunpack.c.l.b16 %v485
    %v1151 = vunpack.c.h.b16 %v485
    %v1152 = vunpack.c.l.b16 %v486
    %v1153 = vunpack.c.h.b16 %v486
    %v1154 = vunpack.c.l.b16 %v487
    %v1155 = vunpack.c.h.b16 %v487
    %v1156 = vunpack.c.l.b16 %v488
    %v1157 = vunpack.c.h.b16 %v488
    %v1158 = vunpack.c.l.b16 %v489
    %v1159 = vunpack.c.h.b16 %v489
    %v1160 = vunpack.c.l.b16 %v490
    %v1161 = vunpack.c.h.b16 %v490
    %v1162 = vunpack.c.l.b16 %v491
    %v1163 = vunpack.c.h.b16 %v491
    %v1164 = vunpack.c.l.b16 %v492
    %v1165 = vunpack.c.h.b16 %v492
    %v1166 = vunpack.c.l.b16 %v493
    %v1167 = vunpack.c.h.b16 %v493
    %v1168 = vunpack.c.l.b16 %v494
    %v1169 = vunpack.c.h.b16 %v494
    %v1170 = vunpack.c.l.b16 %v495
    %v1171 = vunpack.c.h.b16 %v495
    %v1172 = vunpack.c.l.b16 %v496
    %v1173 = vunpack.c.h.b16 %v496
    %v1174 = vunpack.c.l.b16 %v497
    %v1175 = vunpack.c.h.b16 %v497
    %v1176 = vunpack.c.l.b16 %v498
    %v1177 = vunpack.c.h.b16 %v498
    %v1178 = vunpack.c.l.b16 %v499
    %v1179 = vunpack.c.h.b16 %v499
    %v1180 = vunpack.c.l.b16 %v500
    %v1181 = vunpack.c.h.b16 %v500
    %v1182 = vunpack.c.l.b16 %v501
    %v1183 = vunpack.c.h.b16 %v501
    %v1184 = vunpack.c.l.b16 %v502
    %v1185 = vunpack.c.h.b16 %v502
    %v1186 = vunpack.c.l.b16 %v503
    %v1187 = vunpack.c.h.b16 %v503
    %v1188 = vunpack.c.l.b16 %v504
    %v1189 = vunpack.c.h.b16 %v504
    %v1190 = vunpack.c.l.b16 %v505
    %v1191 = vunpack.c.h.b16 %v505
    %v1192 = vunpack.c.l.b16 %v506
    %v1193 = vunpack.c.h.b16 %v506
    %v1194 = vunpack.c.l.b16 %v507
    %v1195 = vunpack.c.h.b16 %v507
    %v1196 = vunpack.c.l.b16 %v508
    %v1197 = vunpack.c.h.b16 %v508
    %v1198 = vunpack.c.l.b16 %v509
    %v1199 = vunpack.c.h.b16 %v509
    %v1200 = vunpack.c.l.b16 %v510
    %v1201 = vunpack.c.h.b16 %v510
    %v1202 = vunpack.c.l.b16 %v511
    %v1203 = vunpack.c.h.b16 %v511
    %v1204 = vunpack.c.l.b16 %v512
    %v1205 = vunpack.c.h.b16 %v512
    %v1206 = vunpack.c.l.b16 %v513
    %v1207 = vunpack.c.h.b16 %v513
    %v1208 = vunpack.c.l.b16 %v514
    %v1209 = vunpack.c.h.b16 %v514
    %v1210 = vunpack.c.l.b16 %v515
    %v1211 = vunpack.c.h.b16 %v515
    %v1212 = vunpack.c.l.b16 %v516
    %v1213 = vunpack.c.h.b16 %v516
    %v1214 = vunpack.c.l.b16 %v517
    %v1215 = vunpack.c.h.b16 %v517
    %v1216 = vunpack.c.l.b16 %v518
    %v1217 = vunpack.c.h.b16 %v518
    %v1218 = vunpack.c.l.b16 %v519
    %v1219 = vunpack.c.h.b16 %v519
    %v1220 = vunpack.c.l.b16 %v520
    %v1221 = vunpack.c.h.b16 %v520
    %v1222 = vunpack.c.l.b16 %v521
    %v1223 = vunpack.c.h.b16 %v521
    %v1224 = vunpack.c.l.b16 %v522
    %v1225 = vunpack.c.h.b16 %v522
    %v1226 = vunpack.c.l.b16 %v523
    %v1227 = vunpack.c.h.b16 %v523
    %v1228 = vunpack.c.l.b16 %v524
    %v1229 = vunpack.c.h.b16 %v524
    %v1230 = vunpack.c.l.b16 %v525
    %v1231 = vunpack.c.h.b16 %v525
    %v1232 = vunpack.c.l.b16 %v526
    %v1233 = vunpack.c.h.b16 %v526
    %v1234 = vunpack.c.l.b16 %v527
    %v1235 = vunpack.c.h.b16 %v527
    %v1236 = vunpack.c.l.b16 %v528
    %v1237 = vunpack.c.h.b16 %v528
    %v1238 = vunpack.c.l.b16 %v529
    %v1239 = vunpack.c.h.b16 %v529
    %v1240 = vunpack.c.l.b16 %v530
    %v1241 = vunpack.c.h.b16 %v530
    %v1242 = vunpack.c.l.b16 %v531
    %v1243 = vunpack.c.h.b16 %v531
    %v1244 = vunpack.c.l.b16 %v532
    %v1245 = vunpack.c.h.b16 %v532
    %v1246 = vunpack.c.l.b16 %v533
    %v1247 = vunpack.c.h.b16 %v533
    %v1248 = vunpack.c.l.b16 %v534
    %v1249 = vunpack.c.h.b16 %v534
    %v1250 = vunpack.c.l.b16 %v535
    %v1251 = vunpack.c.h.b16 %v535
    %v1252 = vunpack.c.l.b16 %v536
    %v1253 = vunpack.c.h.b16 %v536
    %v1254 = vunpack.c.l.b16 %v537
    %v1255 = vunpack.c.h.b16 %v537
    %v1256 = vunpack.c.l.b16 %v538
    %v1257 = vunpack.c.h.b16 %v538
    %v1258 = vunpack.c.l.b16 %v539
    %v1259 = vunpack.c.h.b16 %v539
    %v1260 = vunpack.c.l.b16 %v540
    %v1261 = vunpack.c.h.b16 %v540
    %v1262 = vunpack.c.l.b16 %v541
    %v1263 = vunpack.c.h.b16 %v541
    %v1264 = vunpack.c.l.b16 %v542
    %v1265 = vunpack.c.h.b16 %v542
    %v1266 = vunpack.c.l.b16 %v543
    %v1267 = vunpack.c.h.b16 %v543
    %v1268 = vunpack.c.l.b16 %v544
    %v1269 = vunpack.c.h.b16 %v544
    %v1270 = vunpack.c.l.b16 %v545
    %v1271 = vunpack.c.h.b16 %v545
    %v1272 = vunpack.c.l.b16 %v546
    %v1273 = vunpack.c.h.b16 %v546
    %v1274 = vunpack.c.l.b16 %v547
    %v1275 = vunpack.c.h.b16 %v547
    %v1276 = vunpack.c.l.b16 %v548
    %v1277 = vunpack.c.h.b16 %v548
    %v1278 = vunpack.c.l.b16 %v549
    %v1279 = vunpack.c.h.b16 %v549
    %v1280 = vunpack.c.l.b16 %v550
    %v1281 = vunpack.c.h.b16 %v550
    %v1282 = vunpack.c.l.b16 %v551
    %v1283 = vunpack.c.h.b16 %v551
    %v1284 = vunpack.c.l.b16 %v552
    %v1285 = vunpack.c.h.b16 %v552
    %v1286 = vunpack.c.l.b16 %v553
    %v1287 = vunpack.c.h.b16 %v553
    %v1288 = vunpack.c.l.b16 %v554
    %v1289 = vunpack.c.h.b16 %v554
    %v1290 = vunpack.c.l.b16 %v555
    %v1291 = vunpack.c.h.b16 %v555
    %v1292 = vunpack.c.l.b16 %v556
    %v1293 = vunpack.c.h.b16 %v556
    %v1294 = vunpack.c.l.b16 %v557
    %v1295 = vunpack.c.h.b16 %v557
    %v1296 = vunpack.c.l.b16 %v558
    %v1297 = vunpack.c.h.b16 %v558
    %v1298 = vunpack.c.l.b16 %v559
    %v1299 = vunpack.c.h.b16 %v559
    %v1300 = vunpack.c.l.b16 %v560
    %v1301 = vunpack.c.h.b16 %v560
    %v1302 = vunpack.c.l.b16 %v561
    %v1303 = vunpack.c.h.b16 %v561
    %v1304 = vunpack.c.l.b16 %v562
    %v1305 = vunpack.c.h.b16 %v562
    %v1306 = vunpack.c.l.b16 %v563
    %v1307 = vunpack.c.h.b16 %v563
    %v1308 = vunpack.c.l.b16 %v564
    %v1309 = vunpack.c.h.b16 %v564
    %v1310 = vunpack.c.l.b16 %v565
    %v1311 = vunpack.c.h.b16 %v565
    %v1312 = vunpack.c.l.b16 %v566
    %v1313 = vunpack.c.h.b16 %v566
    %v1314 = vunpack.c.l.b16 %v567
    %v1315 = vunpack.c.h.b16 %v567
    %v1316 = vunpack.c.l.b16 %v568
    %v1317 = vunpack.c.h.b16 %v568
    %v1318 = vunpack.c.l.b16 %v569
    %v1319 = vunpack.c.h.b16 %v569
    %v1320 = vunpack.c.l.b16 %v570
    %v1321 = vunpack.c.h.b16 %v570
    %v1322 = vunpack.c.l.b16 %v571
    %v1323 = vunpack.c.h.b16 %v571
    %v1324 = vunpack.c.l.b16 %v572
    %v1325 = vunpack.c.h.b16 %v572
    %v1326 = vunpack.c.l.b16 %v573
    %v1327 = vunpack.c.h.b16 %v573
    %v1328 = vunpack.c.l.b16 %v574
    %v1329 = vunpack.c.h.b16 %v574
    %v1330 = vunpack.c.l.b16 %v575
    %v1331 = vunpack.c.h.b16 %v575
    %v1332 = vunpack.c.l.b16 %v576
    %v1333 = vunpack.c.h.b16 %v576
    %v1334 = vunpack.c.l.b16 %v577
    %v1335 = vunpack.c.h.b16 %v577
    %v1336 = vunpack.c.l.b16 %v578
    %v1337 = vunpack.c.h.b16 %v578
    %v1338 = vunpack.c.l.b16 %v579
    %v1339 = vunpack.c.h.b16 %v579
    %v1340 = vunpack.c.l.b16 %v580
    %v1341 = vunpack.c.h.b16 %v580
    %v1342 = vunpack.c.l.b16 %v581
    %v1343 = vunpack.c.h.b16 %v581
    %v1344 = vunpack.c.l.b16 %v582
    %v1345 = vunpack.c.h.b16 %v582
    %v1346 = vunpack.c.l.b16 %v583
    %v1347 = vunpack.c.h.b16 %v583
    %v1348 = vunpack.c.l.b16 %v584
    %v1349 = vunpack.c.h.b16 %v584
    %v1350 = vunpack.c.l.b16 %v585
    %v1351 = vunpack.c.h.b16 %v585
    %v1352 = vunpack.c.l.b16 %v586
    %v1353 = vunpack.c.h.b16 %v586
    %v1354 = vunpack.c.l.b16 %v587
    %v1355 = vunpack.c.h.b16 %v587
    %v1356 = vunpack.c.l.b16 %v588
    %v1357 = vunpack.c.h.b16 %v588
    %v1358 = vunpack.c.l.b16 %v589
    %v1359 = vunpack.c.h.b16 %v589
    %v1360 = vunpack.c.l.b16 %v590
    %v1361 = vunpack.c.h.b16 %v590
    %v1362 = vunpack.c.l.b16 %v591
    %v1363 = vunpack.c.h.b16 %v591
    %v1364 = vunpack.c.l.b16 %v592
    %v1365 = vunpack.c.h.b16 %v592
    %v1366 = vunpack.c.l.b16 %v593
    %v1367 = vunpack.c.h.b16 %v593
    %v1368 = vunpack.c.l.b16 %v594
    %v1369 = vunpack.c.h.b16 %v594
    %v1370 = vunpack.c.l.b16 %v595
    %v1371 = vunpack.c.h.b16 %v595
    %v1372 = vunpack.c.l.b16 %v596
    %v1373 = vunpack.c.h.b16 %v596
    %v1374 = vunpack.c.l.b16 %v597
    %v1375 = vunpack.c.h.b16 %v597
    %v1376 = vunpack.c.l.b16 %v598
    %v1377 = vunpack.c.h.b16 %v598
    %v1378 = vunpack.c.l.b16 %v599
    %v1379 = vunpack.c.h.b16 %v599
    %v1380 = vunpack.c.l.b16 %v600
    %v1381 = vunpack.c.h.b16 %v600
    %v1382 = vunpack.c.l.b16 %v601
    %v1383 = vunpack.c.h.b16 %v601
    %v1384 = vunpack.c.l.b16 %v602
    %v1385 = vunpack.c.h.b16 %v602
    %v1386 = vunpack.c.l.b16 %v603
    %v1387 = vunpack.c.h.b16 %v603
    %v1388 = vunpack.c.l.b16 %v604
    %v1389 = vunpack.c.h.b16 %v604
    %v1390 = vunpack.c.l.b16 %v605
    %v1391 = vunpack.c.h.b16 %v605
    %v1392 = vunpack.c.l.b16 %v606
    %v1393 = vunpack.c.h.b16 %v606
    %v1394 = vunpack.c.l.b16 %v607
    %v1395 = vunpack.c.h.b16 %v607
    %v1396 = vunpack.c.l.b16 %v608
    %v1397 = vunpack.c.h.b16 %v608
    %v1398 = vunpack.c.l.b16 %v609
    %v1399 = vunpack.c.h.b16 %v609
    %v1400 = vunpack.c.l.b16 %v610
    %v1401 = vunpack.c.h.b16 %v610
    %v1402 = vunpack.c.l.b16 %v611
    %v1403 = vunpack.c.h.b16 %v611
    %v1404 = vunpack.c.l.b16 %v612
    %v1405 = vunpack.c.h.b16 %v612
    %v1406 = vunpack.c.l.b16 %v613
    %v1407 = vunpack.c.h.b16 %v613
    %v1408 = vunpack.c.l.b16 %v614
    %v1409 = vunpack.c.h.b16 %v614
    %v1410 = vunpack.c.l.b16 %v615
    %v1411 = vunpack.c.h.b16 %v615
    %v1412 = vunpack.c.l.b16 %v616
    %v1413 = vunpack.c.h.b16 %v616
    %v1414 = vunpack.c.l.b16 %v617
    %v1415 = vunpack.c.h.b16 %v617
    %v1416 = vunpack.c.l.b16 %v618
    %v1417 = vunpack.c.h.b16 %v618
    %v1418 = vunpack.c.l.b16 %v619
    %v1419 = vunpack.c.h.b16 %v619
    %v1420 = vunpack.c.l.b16 %v620
    %v1421 = vunpack.c.h.b16 %v620
    %v1422 = vunpack.c.l.b16 %v621
    %v1423 = vunpack.c.h.b16 %v621
    %v1424 = vunpack.c.l.b16 %v622
    %v1425 = vunpack.c.h.b16 %v622
    %v1426 = vunpack.c.l.b16 %v623
    %v1427 = vunpack.c.h.b16 %v623
    %v1428 = vunpack.c.l.b16 %v624
    %v1429 = vunpack.c.h.b16 %v624
    %v1430 = vunpack.c.l.b16 %v625
    %v1431 = vunpack.c.h.b16 %v625
    %v1432 = vunpack.c.l.b16 %v626
    %v1433 = vunpack.c.h.b16 %v626
    %v1434 = vunpack.c.l.b16 %v627
    %v1435 = vunpack.c.h.b16 %v627
    %v1436 = vunpack.c.l.b16 %v628
    %v1437 = vunpack.c.h.b16 %v628
    %v1438 = vunpack.c.l.b16 %v629
    %v1439 = vunpack.c.h.b16 %v629
    %v1440 = vpack.c.b16 %v936, %v928
    %v1441 = vpack.c.b16 %v937, %v929
    %v1442 = vpack.c.b16 %v938, %v930
    %v1443 = vpack.c.b16 %v939, %v931
    %v1444 = vpack.c.b16 %v940, %v932
    %v1445 = vpack.c.b16 %v941, %v933
    %v1446 = vpack.c.b16 %v942, %v934
    %v1447 = vpack.c.b16 %v943, %v935
    %v1448 = vpack.c.b16 %v952, %v944
    %v1449 = vpack.c.b16 %v953, %v945
    %v1450 = vpack.c.b16 %v954, %v946
    %v1451 = vpack.c.b16 %v955, %v947
    %v1452 = vpack.c.b16 %v956, %v948
    %v1453 = vpack.c.b16 %v957, %v949
    %v1454 = vpack.c.b16 %v958, %v950
    %v1455 = vpack.c.b16 %v959, %v951
    %v1456 = vpack.c.b16 %v968, %v960
    %v1457 = vpack.c.b16 %v969, %v961
    %v1458 = vpack.c.b16 %v970, %v962
    %v1459 = vpack.c.b16 %v971, %v963
    %v1460 = vpack.c.b16 %v972, %v964
    %v1461 = vpack.c.b16 %v973, %v965
    %v1462 = vpack.c.b16 %v974, %v966
    %v1463 = vpack.c.b16 %v975, %v967
    %v1464 = vpack.c.b16 %v984, %v976
    %v1465 = vpack.c.b16 %v985, %v977
    %v1466 = vpack.c.b16 %v986, %v978
    %v1467 = vpack.c.b16 %v987, %v979
    %v1468 = vpack.c.b16 %v988, %v980
    %v1469 = vpack.c.b16 %v989, %v981
    %v1470 = vpack.c.b16 %v990, %v982
    %v1471 = vpack.c.b16 %v991, %v983
    %v1472 = vpack.c.b16 %v1000, %v992
    %v1473 = vpack.c.b16 %v1001, %v993
    %v1474 = vpack.c.b16 %v1002, %v994
    %v1475 = vpack.c.b16 %v1003, %v995
    %v1476 = vpack.c.b16 %v1004, %v996
    %v1477 = vpack.c.b16 %v1005, %v997
    %v1478 = vpack.c.b16 %v1006, %v998
    %v1479 = vpack.c.b16 %v1007, %v999
    %v1480 = vpack.c.b16 %v1016, %v1008
    %v1481 = vpack.c.b16 %v1017, %v1009
    %v1482 = vpack.c.b16 %v1018, %v1010
    %v1483 = vpack.c.b16 %v1019, %v1011
    %v1484 = vpack.c.b16 %v1020, %v1012
    %v1485 = vpack.c.b16 %v1021, %v1013
    %v1486 = vpack.c.b16 %v1022, %v1014
    %v1487 = vpack.c.b16 %v1023, %v1015
    %v1488 = vpack.c.b16 %v1032, %v1024
    %v1489 = vpack.c.b16 %v1033, %v1025
    %v1490 = vpack.c.b16 %v1034, %v1026
    %v1491 = vpack.c.b16 %v1035, %v1027
    %v1492 = vpack.c.b16 %v1036, %v1028
    %v1493 = vpack.c.b16 %v1037, %v1029
    %v1494 = vpack.c.b16 %v1038, %v1030
    %v1495 = vpack.c.b16 %v1039, %v1031
    %v1496 = vpack.c.b16 %v1048, %v1040
    %v1497 = vpack.c.b16 %v1049, %v1041
    %v1498 = vpack.c.b16 %v1050, %v1042
    %v1499 = vpack.c.b16 %v1051, %v1043
    %v1500 = vpack.c.b16 %v1052, %v1044
    %v1501 = vpack.c.b16 %v1053, %v1045
    %v1502 = vpack.c.b16 %v1054, %v1046
    %v1503 = vpack.c.b16 %v1055, %v1047
    %v1504 = vpack.c.b16 %v1064, %v1056
    %v1505 = vpack.c.b16 %v1065, %v1057
    %v1506 = vpack.c.b16 %v1066, %v1058
    %v1507 = vpack.c.b16 %v1067, %v1059
    %v1508 = vpack.c.b16 %v1068, %v1060
    %v1509 = vpack.c.b16 %v1069, %v1061
    %v1510 = vpack.c.b16 %v1070, %v1062
    %v1511 = vpack.c.b16 %v1071, %v1063
    %v1512 = vpack.c.b16 %v1080, %v1072
    %v1513 = vpack.c.b16 %v1081, %v1073
    %v1514 = vpack.c.b16 %v1082, %v1074
    %v1515 = vpack.c.b16 %v1083, %v1075
    %v1516 = vpack.c.b16 %v1084, %v1076
    %v1517 = vpack.c.b16 %v1085, %v1077
    %v1518 = vpack.c.b16 %v1086, %v1078
    %v1519 = vpack.c.b16 %v1087, %v1079
    %v1520 = vpack.c.b16 %v1096, %v1088
    %v1521 = vpack.c.b16 %v1097, %v1089
    %v1522 = vpack.c.b16 %v1098, %v1090
    %v1523 = vpack.c.b16 %v1099, %v1091
    %v1524 = vpack.c.b16 %v1100, %v1092
    %v1525 = vpack.c.b16 %v1101, %v1093
    %v1526 = vpack.c.b16 %v1102, %v1094
    %v1527 = vpack.c.b16 %v1103, %v1095
    %v1528 = vpack.c.b16 %v1112, %v1104
    %v1529 = vpack.c.b16 %v1113, %v1105
    %v1530 = vpack.c.b16 %v1114, %v1106
    %v1531 = vpack.c.b16 %v1115, %v1107
    %v1532 = vpack.c.b16 %v1116, %v1108
    %v1533 = vpack.c.b16 %v1117, %v1109
    %v1534 = vpack.c.b16 %v1118, %v1110
    %v1535 = vpack.c.b16 %v1119, %v1111
    %v1536 = vpack.c.b16 %v1128, %v1120
    %v1537 = vpack.c.b16 %v1129, %v1121
    %v1538 = vpack.c.b16 %v1130, %v1122
    %v1539 = vpack.c.b16 %v1131, %v1123
    %v1540 = vpack.c.b16 %v1132, %v1124
    %v1541 = vpack.c.b16 %v1133, %v1125
    %v1542 = vpack.c.b16 %v1134, %v1126
    %v1543 = vpack.c.b16 %v1135, %v1127
    %v1544 = vpack.c.b16 %v1144, %v1136
    %v1545 = vpack.c.b16 %v1145, %v1137
    %v1546 = vpack.c.b16 %v1146, %v1138
    %v1547 = vpack.c.b16 %v1147, %v1139
    %v1548 = vpack.c.b16 %v1148, %v1140
    %v1549 = vpack.c.b16 %v1149, %v1141
    %v1550 = vpack.c.b16 %v1150, %v1142
    %v1551 = vpack.c.b16 %v1151, %v1143
    %v1552 = vpack.c.b16 %v1160, %v1152
    %v1553 = vpack.c.b16 %v1161, %v1153
    %v1554 = vpack.c.b16 %v1162, %v1154
    %v1555 = vpack.c.b16 %v1163, %v1155
    %v1556 = vpack.c.b16 %v1164, %v1156
    %v1557 = vpack.c.b16 %v1165, %v1157
    %v1558 = vpack.c.b16 %v1166, %v1158
    %v1559 = vpack.c.b16 %v1167, %v1159
    %v1560 = vpack.c.b16 %v1176, %v1168
    %v1561 = vpack.c.b16 %v1177, %v1169
    %v1562 = vpack.c.b16 %v1178, %v1170
    %v1563 = vpack.c.b16 %v1179, %v1171
    %v1564 = vpack.c.b16 %v1180, %v1172
    %v1565 = vpack.c.b16 %v1181, %v1173
    %v1566 = vpack.c.b16 %v1182, %v1174
    %v1567 = vpack.c.b16 %v1183, %v1175
    %v1568 = vpack.c.b16 %v1192, %v1184
    %v1569 = vpack.c.b16 %v1193, %v1185
    %v1570 = vpack.c.b16 %v1194, %v1186
    %v1571 = vpack.c.b16 %v1195, %v1187
    %v1572 = vpack.c.b16 %v1196, %v1188
    %v1573 = vpack.c.b16 %v1197, %v1189
    %v1574 = vpack.c.b16 %v1198, %v1190
    %v1575 = vpack.c.b16 %v1199, %v1191
    %v1576 = vpack.c.b16 %v1208, %v1200
    %v1577 = vpack.c.b16 %v1209, %v1201
    %v1578 = vpack.c.b16 %v1210, %v1202
    %v1579 = vpack.c.b16 %v1211, %v1203
    %v1580 = vpack.c.b16 %v1212, %v1204
    %v1581 = vpack.c.b16 %v1213, %v1205
    %v1582 = vpack.c.b16 %v1214, %v1206
    %v1583 = vpack.c.b16 %v1215, %v1207
    %v1584 = vpack.c.b16 %v1224, %v1216
    %v1585 = vpack.c.b16 %v1225, %v1217
    %v1586 = vpack.c.b16 %v1226, %v1218
    %v1587 = vpack.c.b16 %v1227, %v1219
    %v1588 = vpack.c.b16 %v1228, %v1220
    %v1589 = vpack.c.b16 %v1229, %v1221
    %v1590 = vpack.c.b16 %v1230, %v1222
    %v1591 = vpack.c.b16 %v1231, %v1223
    %v1592 = vpack.c.b16 %v1240, %v1232
    %v1593 = vpack.c.b16 %v1241, %v1233
    %v1594 = vpack.c.b16 %v1242, %v1234
    %v1595 = vpack.c.b16 %v1243, %v1235
    %v1596 = vpack.c.b16 %v1244, %v1236
    %v1597 = vpack.c.b16 %v1245, %v1237
    %v1598 = vpack.c.b16 %v1246, %v1238
    %v1599 = vpack.c.b16 %v1247, %v1239
    %v1600 = vpack.c.b16 %v1256, %v1248
    %v1601 = vpack.c.b16 %v1257, %v1249
    %v1602 = vpack.c.b16 %v1258, %v1250
    %v1603 = vpack.c.b16 %v1259, %v1251
    %v1604 = vpack.c.b16 %v1260, %v1252
    %v1605 = vpack.c.b16 %v1261, %v1253
    %v1606 = vpack.c.b16 %v1262, %v1254
    %v1607 = vpack.c.b16 %v1263, %v1255
    %v1608 = vpack.c.b16 %v1272, %v1264
    %v1609 = vpack.c.b16 %v1273, %v1265
    %v1610 = vpack.c.b16 %v1274, %v1266
    %v1611 = vpack.c.b16 %v1275, %v1267
    %v1612 = vpack.c.b16 %v1276, %v1268
    %v1613 = vpack.c.b16 %v1277, %v1269
    %v1614 = vpack.c.b16 %v1278, %v1270
    %v1615 = vpack.c.b16 %v1279, %v1271
    %v1616 = vpack.c.b16 %v1288, %v1280
    %v1617 = vpack.c.b16 %v1289, %v1281
    %v1618 = vpack.c.b16 %v1290, %v1282
    %v1619 = vpack.c.b16 %v1291, %v1283
    %v1620 = vpack.c.b16 %v1292, %v1284
    %v1621 = vpack.c.b16 %v1293, %v1285
    %v1622 = vpack.c.b16 %v1294, %v1286
    %v1623 = vpack.c.b16 %v1295, %v1287
    %v1624 = vpack.c.b16 %v1304, %v1296
    %v1625 = vpack.c.b16 %v1305, %v1297
    %v1626 = vpack.c.b16 %v1306, %v1298
    %v1627 = vpack.c.b16 %v1307, %v1299
    %v1628 = vpack.c.b16 %v1308, %v1300
    %v1629 = vpack.c.b16 %v1309, %v1301
    %v1630 = vpack.c.b16 %v1310, %v1302
    %v1631 = vpack.c.b16 %v1311, %v1303
    %v1632 = vpack.c.b16 %v1320, %v1312
    %v1633 = vpack.c.b16 %v1321, %v1313
    %v1634 = vpack.c.b16 %v1322, %v1314
    %v1635 = vpack.c.b16 %v1323, %v1315
    %v1636 = vpack.c.b16 %v1324, %v1316
    %v1637 = vpack.c.b16 %v1325, %v1317
    %v1638 = vpack.c.b16 %v1326, %v1318
    %v1639 = vpack.c.b16 %v1327, %v1319
    %v1640 = vpack.c.b16 %v1336, %v1328
    %v1641 = vpack.c.b16 %v1337, %v1329
    %v1642 = vpack.c.b16 %v1338, %v1330
    %v1643 = vpack.c.b16 %v1339, %v1331
    %v1644 = vpack.c.b16 %v1340, %v1332
    %v1645 = vpack.c.b16 %v1341, %v1333
    %v1646 = vpack.c.b16 %v1342, %v1334
    %v1647 = vpack.c.b16 %v1343, %v1335
    %v1648 = vpack.c.b16 %v1352, %v1344
    %v1649 = vpack.c.b16 %v1353, %v1345
    %v1650 = vpack.c.b16 %v1354, %v1346
    %v1651 = vpack.c.b16 %v1355, %v1347
    %v1652 = vpack.c.b16 %v1356, %v1348
    %v1653 = vpack.c.b16 %v1357, %v1349
    %v1654 = vpack.c.b16 %v1358, %v1350
    %v1655 = vpack.c.b16 %v1359, %v1351
    %v1656 = vpack.c.b16 %v1368, %v1360
    %v1657 = vpack.c.b16 %v1369, %v1361
    %v1658 = vpack.c.b16 %v1370, %v1362
    %v1659 = vpack.c.b16 %v1371, %v1363
    %v1660 = vpack.c.b16 %v1372, %v1364
    %v1661 = vpack.c.b16 %v1373, %v1365
    %v1662 = vpack.c.b16 %v1374, %v1366
    %v1663 = vpack.c.b16 %v1375, %v1367
    %v1664 = vpack.c.b16 %v1384, %v1376
    %v1665 = vpack.c.b16 %v1385, %v1377
    %v1666 = vpack.c.b16 %v1386, %v1378
    %v1667 = vpack.c.b16 %v1387, %v1379
    %v1668 = vpack.c.b16 %v1388, %v1380
    %v1669 = vpack.c.b16 %v1389, %v1381
    %v1670 = vpack.c.b16 %v1390, %v1382
    %v1671 = vpack.c.b16 %v1391, %v1383
    %v1672 = vpack.c.b16 %v1400, %v1392
    %v1673 = vpack.c.b16 %v1401, %v1393
    %v1674 = vpack.c.b16 %v1402, %v1394
    %v1675 = vpack.c.b16 %v1403, %v1395
    %v1676 = vpack.c.b16 %v1404, %v1396
    %v1677 = vpack.c.b16 %v1405, %v1397
    %v1678 = vpack.c.b16 %v1406, %v1398
    %v1679 = vpack.c.b16 %v1407, %v1399
    %v1680 = vpack.c.b16 %v1416, %v1408
    %v1681 = vpack.c.b16 %v1417, %v1409
    %v1682 = vpack.c.b16 %v1418, %v1410
    %v1683 = vpack.c.b16 %v1419, %v1411
    %v1684 = vpack.c.b16 %v1420, %v1412
    %v1685 = vpack.c.b16 %v1421, %v1413
    %v1686 = vpack.c.b16 %v1422, %v1414
    %v1687 = vpack.c.b16 %v1423, %v1415
    %v1688 = vpack.c.b16 %v1432, %v1424
    %v1689 = vpack.c.b16 %v1433, %v1425
    %v1690 = vpack.c.b16 %v1434, %v1426
    %v1691 = vpack.c.b16 %v1435, %v1427
    %v1692 = vpack.c.b16 %v1436, %v1428
    %v1693 = vpack.c.b16 %v1437, %v1429
    %v1694 = vpack.c.b16 %v1438, %v1430
    %v1695 = vpack.c.b16 %v1439, %v1431
    %1952 = vmatprep.subr.bf16.mxu0 %v1441
    %1953 = vmatpush1.bf16.msra.mxu0 %v1440
    %1954 = vmatprep.subr.bf16.mxu0 %v1449
    %1955 = vmatpush1.bf16.msra.mxu0 %v1448
    %1956 = vmatprep.subr.bf16.mxu0 %v1457
    %1957 = vmatpush1.bf16.msra.mxu0 %v1456
    %1958 = vmatprep.subr.bf16.mxu0 %v1465
    %1959 = vmatpush1.bf16.msra.mxu0 %v1464
    %1960 = vmatprep.subr.bf16.mxu0 %v1473
    %1961 = vmatpush1.bf16.msra.mxu0 %v1472
    %1962 = vmatprep.subr.bf16.mxu0 %v1481
    %1963 = vmatpush1.bf16.msra.mxu0 %v1480
    %1964 = vmatprep.subr.bf16.mxu0 %v1489
    %1965 = vmatpush1.bf16.msra.mxu0 %v1488
    %1966 = vmatprep.subr.bf16.mxu0 %v1497
    %1967 = vmatpush1.bf16.msra.mxu0 %v1496
    %1968 = vmatprep.subr.bf16.mxu0 %v1505
    %1969 = vmatpush1.bf16.msra.mxu0 %v1504
    %1970 = vmatprep.subr.bf16.mxu0 %v1513
    %1971 = vmatpush1.bf16.msra.mxu0 %v1512
    %1972 = vmatprep.subr.bf16.mxu0 %v1521
    %1973 = vmatpush1.bf16.msra.mxu0 %v1520
    %1974 = vmatprep.subr.bf16.mxu0 %v1529
    %1975 = vmatpush1.bf16.msra.mxu0 %v1528
    %1976 = vmatprep.subr.bf16.mxu0 %v1537
    %1977 = vmatpush1.bf16.msra.mxu0 %v1536
    %1978 = vmatprep.subr.bf16.mxu0 %v1545
    %1979 = vmatpush1.bf16.msra.mxu0 %v1544
    %1980 = vmatprep.subr.bf16.mxu0 %v1553
    %1981 = vmatpush1.bf16.msra.mxu0 %v1552
    %1982 = vmatprep.subr.bf16.mxu0 %v1561
    %1983 = vmatpush1.bf16.msra.mxu0 %v1560
    %1984 = vmatprep.mubr.bf16.mxu0 %v371
    %1985 = vmatmul.mubr.bf16.gmra.mrb[0].mxu0 %v370
    %v1986 = vpop.f32.mrb[0].mxu0
    %v1987 = vadd.f32 %v635, %v1986
    %v1988 = vpop.f32.mrb[0].mxu0
    %v1989 = vadd.f32 %v639, %v1988
    %v1990 = vpop.f32.mrb[0].mxu0
    %v1991 = vpop.f32.mrb[0].mxu0
    %1992 = vdwg.mxu0
    %1993 = vmatprep.subr.bf16.mxu0 %v1569
    %1994 = vmatpush1.bf16.msra.mxu0 %v1568
    %1995 = vmatprep.subr.bf16.mxu0 %v1577
    %1996 = vmatpush1.bf16.msra.mxu0 %v1576
    %1997 = vmatprep.subr.bf16.mxu0 %v1585
    %1998 = vmatpush1.bf16.msra.mxu0 %v1584
    %1999 = vmatprep.subr.bf16.mxu0 %v1593
    %2000 = vmatpush1.bf16.msra.mxu0 %v1592
    %2001 = vmatprep.subr.bf16.mxu0 %v1601
    %2002 = vmatpush1.bf16.msra.mxu0 %v1600
    %2003 = vmatprep.subr.bf16.mxu0 %v1609
    %2004 = vmatpush1.bf16.msra.mxu0 %v1608
    %2005 = vmatprep.subr.bf16.mxu0 %v1617
    %2006 = vmatpush1.bf16.msra.mxu0 %v1616
    %2007 = vmatprep.subr.bf16.mxu0 %v1625
    %2008 = vmatpush1.bf16.msra.mxu0 %v1624
    %2009 = vmatprep.subr.bf16.mxu0 %v1633
    %2010 = vmatpush1.bf16.msra.mxu0 %v1632
    %2011 = vmatprep.subr.bf16.mxu0 %v1641
    %2012 = vmatpush1.bf16.msra.mxu0 %v1640
    %2013 = vmatprep.subr.bf16.mxu0 %v1649
    %2014 = vmatpush1.bf16.msra.mxu0 %v1648
    %2015 = vmatprep.subr.bf16.mxu0 %v1657
    %2016 = vmatpush1.bf16.msra.mxu0 %v1656
    %2017 = vmatprep.subr.bf16.mxu0 %v1665
    %2018 = vmatpush1.bf16.msra.mxu0 %v1664
    %2019 = vmatprep.subr.bf16.mxu0 %v1673
    %2020 = vmatpush1.bf16.msra.mxu0 %v1672
    %2021 = vmatprep.subr.bf16.mxu0 %v1681
    %2022 = vmatpush1.bf16.msra.mxu0 %v1680
    %2023 = vmatprep.subr.bf16.mxu0 %v1689
    %2024 = vmatpush1.bf16.msra.mxu0 %v1688
    %2025 = vmatprep.mubr.bf16.mxu0 %v373
    %2026 = vmatmul.mubr.bf16.gmra.mrb[0].mxu0 %v372
    %v2027 = vpop.f32.mrb[0].mxu0
    %v2028 = vadd.f32 %v1987, %v2027
    %v2029 = vpop.f32.mrb[0].mxu0
    %v2030 = vadd.f32 %v1989, %v2029
    %v2031 = vpop.f32.mrb[0].mxu0
    %v2032 = vpop.f32.mrb[0].mxu0
    %2033 = vdwg.mxu0
    %2034 = vmatprep.subr.bf16.mxu0 %v1443
    %2035 = vmatpush1.bf16.msra.mxu0 %v1442
    %2036 = vmatprep.subr.bf16.mxu0 %v1451
    %2037 = vmatpush1.bf16.msra.mxu0 %v1450
    %2038 = vmatprep.subr.bf16.mxu0 %v1459
    %2039 = vmatpush1.bf16.msra.mxu0 %v1458
    %2040 = vmatprep.subr.bf16.mxu0 %v1467
    %2041 = vmatpush1.bf16.msra.mxu0 %v1466
    %2042 = vmatprep.subr.bf16.mxu0 %v1475
    %2043 = vmatpush1.bf16.msra.mxu0 %v1474
    %2044 = vmatprep.subr.bf16.mxu0 %v1483
    %2045 = vmatpush1.bf16.msra.mxu0 %v1482
    %2046 = vmatprep.subr.bf16.mxu0 %v1491
    %2047 = vmatpush1.bf16.msra.mxu0 %v1490
    %2048 = vmatprep.subr.bf16.mxu0 %v1499
    %2049 = vmatpush1.bf16.msra.mxu0 %v1498
    %2050 = vmatprep.subr.bf16.mxu0 %v1507
    %2051 = vmatpush1.bf16.msra.mxu0 %v1506
    %2052 = vmatprep.subr.bf16.mxu0 %v1515
    %2053 = vmatpush1.bf16.msra.mxu0 %v1514
    %2054 = vmatprep.subr.bf16.mxu0 %v1523
    %2055 = vmatpush1.bf16.msra.mxu0 %v1522
    %2056 = vmatprep.subr.bf16.mxu0 %v1531
    %2057 = vmatpush1.bf16.msra.mxu0 %v1530
    %2058 = vmatprep.subr.bf16.mxu0 %v1539
    %2059 = vmatpush1.bf16.msra.mxu0 %v1538
    %2060 = vmatprep.subr.bf16.mxu0 %v1547
    %2061 = vmatpush1.bf16.msra.mxu0 %v1546
    %2062 = vmatprep.subr.bf16.mxu0 %v1555
    %2063 = vmatpush1.bf16.msra.mxu0 %v1554
    %2064 = vmatprep.subr.bf16.mxu0 %v1563
    %2065 = vmatpush1.bf16.msra.mxu0 %v1562
    %2066 = vmatprep.mubr.bf16.mxu0 %v371
    %2067 = vmatmul.mubr.bf16.gmra.mrb[0].mxu0 %v370
    %v2068 = vpop.f32.mrb[0].mxu0
    %v2069 = vadd.f32 %v643, %v2068
    %v2070 = vpop.f32.mrb[0].mxu0
    %v2071 = vadd.f32 %v647, %v2070
    %v2072 = vpop.f32.mrb[0].mxu0
    %v2073 = vpop.f32.mrb[0].mxu0
    %2074 = vdwg.mxu0
    %2075 = vmatprep.subr.bf16.mxu0 %v1571
    %2076 = vmatpush1.bf16.msra.mxu0 %v1570
    %2077 = vmatprep.subr.bf16.mxu0 %v1579
    %2078 = vmatpush1.bf16.msra.mxu0 %v1578
    %2079 = vmatprep.subr.bf16.mxu0 %v1587
    %2080 = vmatpush1.bf16.msra.mxu0 %v1586
    %2081 = vmatprep.subr.bf16.mxu0 %v1595
    %2082 = vmatpush1.bf16.msra.mxu0 %v1594
    %2083 = vmatprep.subr.bf16.mxu0 %v1603
    %2084 = vmatpush1.bf16.msra.mxu0 %v1602
    %2085 = vmatprep.subr.bf16.mxu0 %v1611
    %2086 = vmatpush1.bf16.msra.mxu0 %v1610
    %2087 = vmatprep.subr.bf16.mxu0 %v1619
    %2088 = vmatpush1.bf16.msra.mxu0 %v1618
    %2089 = vmatprep.subr.bf16.mxu0 %v1627
    %2090 = vmatpush1.bf16.msra.mxu0 %v1626
    %2091 = vmatprep.subr.bf16.mxu0 %v1635
    %2092 = vmatpush1.bf16.msra.mxu0 %v1634
    %2093 = vmatprep.subr.bf16.mxu0 %v1643
    %2094 = vmatpush1.bf16.msra.mxu0 %v1642
    %2095 = vmatprep.subr.bf16.mxu0 %v1651
    %2096 = vmatpush1.bf16.msra.mxu0 %v1650
    %2097 = vmatprep.subr.bf16.mxu0 %v1659
    %2098 = vmatpush1.bf16.msra.mxu0 %v1658
    %2099 = vmatprep.subr.bf16.mxu0 %v1667
    %2100 = vmatpush1.bf16.msra.mxu0 %v1666
    %2101 = vmatprep.subr.bf16.mxu0 %v1675
    %2102 = vmatpush1.bf16.msra.mxu0 %v1674
    %2103 = vmatprep.subr.bf16.mxu0 %v1683
    %2104 = vmatpush1.bf16.msra.mxu0 %v1682
    %2105 = vmatprep.subr.bf16.mxu0 %v1691
    %2106 = vmatpush1.bf16.msra.mxu0 %v1690
    %2107 = vmatprep.mubr.bf16.mxu0 %v373
    %2108 = vmatmul.mubr.bf16.gmra.mrb[0].mxu0 %v372
    %v2109 = vpop.f32.mrb[0].mxu0
    %v2110 = vadd.f32 %v2069, %v2109
    %v2111 = vpop.f32.mrb[0].mxu0
    %v2112 = vadd.f32 %v2071, %v2111
    %v2113 = vpop.f32.mrb[0].mxu0
    %v2114 = vpop.f32.mrb[0].mxu0
    %2115 = vdwg.mxu0
    %2116 = vmatprep.subr.bf16.mxu0 %v1445
    %2117 = vmatpush1.bf16.msra.mxu0 %v1444
    %2118 = vmatprep.subr.bf16.mxu0 %v1453
    %2119 = vmatpush1.bf16.msra.mxu0 %v1452
    %2120 = vmatprep.subr.bf16.mxu0 %v1461
    %2121 = vmatpush1.bf16.msra.mxu0 %v1460
    %2122 = vmatprep.subr.bf16.mxu0 %v1469
    %2123 = vmatpush1.bf16.msra.mxu0 %v1468
    %2124 = vmatprep.subr.bf16.mxu0 %v1477
    %2125 = vmatpush1.bf16.msra.mxu0 %v1476
    %2126 = vmatprep.subr.bf16.mxu0 %v1485
    %2127 = vmatpush1.bf16.msra.mxu0 %v1484
    %2128 = vmatprep.subr.bf16.mxu0 %v1493
    %2129 = vmatpush1.bf16.msra.mxu0 %v1492
    %2130 = vmatprep.subr.bf16.mxu0 %v1501
    %2131 = vmatpush1.bf16.msra.mxu0 %v1500
    %2132 = vmatprep.subr.bf16.mxu0 %v1509
    %2133 = vmatpush1.bf16.msra.mxu0 %v1508
    %2134 = vmatprep.subr.bf16.mxu0 %v1517
    %2135 = vmatpush1.bf16.msra.mxu0 %v1516
    %2136 = vmatprep.subr.bf16.mxu0 %v1525
    %2137 = vmatpush1.bf16.msra.mxu0 %v1524
    %2138 = vmatprep.subr.bf16.mxu0 %v1533
    %2139 = vmatpush1.bf16.msra.mxu0 %v1532
    %2140 = vmatprep.subr.bf16.mxu0 %v1541
    %2141 = vmatpush1.bf16.msra.mxu0 %v1540
    %2142 = vmatprep.subr.bf16.mxu0 %v1549
    %2143 = vmatpush1.bf16.msra.mxu0 %v1548
    %2144 = vmatprep.subr.bf16.mxu0 %v1557
    %2145 = vmatpush1.bf16.msra.mxu0 %v1556
    %2146 = vmatprep.subr.bf16.mxu0 %v1565
    %2147 = vmatpush1.bf16.msra.mxu0 %v1564
    %2148 = vmatprep.mubr.bf16.mxu0 %v371
    %2149 = vmatmul.mubr.bf16.gmra.mrb[0].mxu0 %v370
    %v2150 = vpop.f32.mrb[0].mxu0
    %v2151 = vadd.f32 %v651, %v2150
    %v2152 = vpop.f32.mrb[0].mxu0
    %v2153 = vadd.f32 %v655, %v2152
    %v2154 = vpop.f32.mrb[0].mxu0
    %v2155 = vpop.f32.mrb[0].mxu0
    %2156 = vdwg.mxu0
    %2157 = vmatprep.subr.bf16.mxu0 %v1573
    %2158 = vmatpush1.bf16.msra.mxu0 %v1572
    %2159 = vmatprep.subr.bf16.mxu0 %v1581
    %2160 = vmatpush1.bf16.msra.mxu0 %v1580
    %2161 = vmatprep.subr.bf16.mxu0 %v1589
    %2162 = vmatpush1.bf16.msra.mxu0 %v1588
    %2163 = vmatprep.subr.bf16.mxu0 %v1597
    %2164 = vmatpush1.bf16.msra.mxu0 %v1596
    %2165 = vmatprep.subr.bf16.mxu0 %v1605
    %2166 = vmatpush1.bf16.msra.mxu0 %v1604
    %2167 = vmatprep.subr.bf16.mxu0 %v1613
    %2168 = vmatpush1.bf16.msra.mxu0 %v1612
    %2169 = vmatprep.subr.bf16.mxu0 %v1621
    %2170 = vmatpush1.bf16.msra.mxu0 %v1620
    %2171 = vmatprep.subr.bf16.mxu0 %v1629
    %2172 = vmatpush1.bf16.msra.mxu0 %v1628
    %2173 = vmatprep.subr.bf16.mxu0 %v1637
    %2174 = vmatpush1.bf16.msra.mxu0 %v1636
    %2175 = vmatprep.subr.bf16.mxu0 %v1645
    %2176 = vmatpush1.bf16.msra.mxu0 %v1644
    %2177 = vmatprep.subr.bf16.mxu0 %v1653
    %2178 = vmatpush1.bf16.msra.mxu0 %v1652
    %2179 = vmatprep.subr.bf16.mxu0 %v1661
    %2180 = vmatpush1.bf16.msra.mxu0 %v1660
    %2181 = vmatprep.subr.bf16.mxu0 %v1669
    %2182 = vmatpush1.bf16.msra.mxu0 %v1668
    %2183 = vmatprep.subr.bf16.mxu0 %v1677
    %2184 = vmatpush1.bf16.msra.mxu0 %v1676
    %2185 = vmatprep.subr.bf16.mxu0 %v1685
    %2186 = vmatpush1.bf16.msra.mxu0 %v1684
    %2187 = vmatprep.subr.bf16.mxu0 %v1693
    %2188 = vmatpush1.bf16.msra.mxu0 %v1692
    %2189 = vmatprep.mubr.bf16.mxu0 %v373
    %2190 = vmatmul.mubr.bf16.gmra.mrb[0].mxu0 %v372
    %v2191 = vpop.f32.mrb[0].mxu0
    %v2192 = vadd.f32 %v2151, %v2191
    %v2193 = vpop.f32.mrb[0].mxu0
    %v2194 = vadd.f32 %v2153, %v2193
    %v2195 = vpop.f32.mrb[0].mxu0
    %v2196 = vpop.f32.mrb[0].mxu0
    %2197 = vdwg.mxu0
    %2198 = vmatprep.subr.bf16.mxu0 %v1447
    %2199 = vmatpush1.bf16.msra.mxu0 %v1446
    %2200 = vmatprep.subr.bf16.mxu0 %v1455
    %2201 = vmatpush1.bf16.msra.mxu0 %v1454
    %2202 = vmatprep.subr.bf16.mxu0 %v1463
    %2203 = vmatpush1.bf16.msra.mxu0 %v1462
    %2204 = vmatprep.subr.bf16.mxu0 %v1471
    %2205 = vmatpush1.bf16.msra.mxu0 %v1470
    %2206 = vmatprep.subr.bf16.mxu0 %v1479
    %2207 = vmatpush1.bf16.msra.mxu0 %v1478
    %2208 = vmatprep.subr.bf16.mxu0 %v1487
    %2209 = vmatpush1.bf16.msra.mxu0 %v1486
    %2210 = vmatprep.subr.bf16.mxu0 %v1495
    %2211 = vmatpush1.bf16.msra.mxu0 %v1494
    %2212 = vmatprep.subr.bf16.mxu0 %v1503
    %2213 = vmatpush1.bf16.msra.mxu0 %v1502
    %2214 = vmatprep.subr.bf16.mxu0 %v1511
    %2215 = vmatpush1.bf16.msra.mxu0 %v1510
    %2216 = vmatprep.subr.bf16.mxu0 %v1519
    %2217 = vmatpush1.bf16.msra.mxu0 %v1518
    %2218 = vmatprep.subr.bf16.mxu0 %v1527
    %2219 = vmatpush1.bf16.msra.mxu0 %v1526
    %2220 = vmatprep.subr.bf16.mxu0 %v1535
    %2221 = vmatpush1.bf16.msra.mxu0 %v1534
    %2222 = vmatprep.subr.bf16.mxu0 %v1543
    %2223 = vmatpush1.bf16.msra.mxu0 %v1542
    %2224 = vmatprep.subr.bf16.mxu0 %v1551
    %2225 = vmatpush1.bf16.msra.mxu0 %v1550
    %2226 = vmatprep.subr.bf16.mxu0 %v1559
    %2227 = vmatpush1.bf16.msra.mxu0 %v1558
    %2228 = vmatprep.subr.bf16.mxu0 %v1567
    %2229 = vmatpush1.bf16.msra.mxu0 %v1566
    %2230 = vmatprep.mubr.bf16.mxu0 %v371
    %2231 = vmatmul.mubr.bf16.gmra.mrb[0].mxu0 %v370
    %v2232 = vpop.f32.mrb[0].mxu0
    %v2233 = vadd.f32 %v659, %v2232
    %v2234 = vpop.f32.mrb[0].mxu0
    %v2235 = vadd.f32 %v663, %v2234
    %v2236 = vpop.f32.mrb[0].mxu0
    %v2237 = vpop.f32.mrb[0].mxu0
    %2238 = vdwg.mxu0
    %2239 = vmatprep.subr.bf16.mxu0 %v1575
    %2240 = vmatpush1.bf16.msra.mxu0 %v1574
    %2241 = vmatprep.subr.bf16.mxu0 %v1583
    %2242 = vmatpush1.bf16.msra.mxu0 %v1582
    %2243 = vmatprep.subr.bf16.mxu0 %v1591
    %2244 = vmatpush1.bf16.msra.mxu0 %v1590
    %2245 = vmatprep.subr.bf16.mxu0 %v1599
    %2246 = vmatpush1.bf16.msra.mxu0 %v1598
    %2247 = vmatprep.subr.bf16.mxu0 %v1607
    %2248 = vmatpush1.bf16.msra.mxu0 %v1606
    %2249 = vmatprep.subr.bf16.mxu0 %v1615
    %2250 = vmatpush1.bf16.msra.mxu0 %v1614
    %2251 = vmatprep.subr.bf16.mxu0 %v1623
    %2252 = vmatpush1.bf16.msra.mxu0 %v1622
    %2253 = vmatprep.subr.bf16.mxu0 %v1631
    %2254 = vmatpush1.bf16.msra.mxu0 %v1630
    %2255 = vmatprep.subr.bf16.mxu0 %v1639
    %2256 = vmatpush1.bf16.msra.mxu0 %v1638
    %2257 = vmatprep.subr.bf16.mxu0 %v1647
    %2258 = vmatpush1.bf16.msra.mxu0 %v1646
    %2259 = vmatprep.subr.bf16.mxu0 %v1655
    %2260 = vmatpush1.bf16.msra.mxu0 %v1654
    %2261 = vmatprep.subr.bf16.mxu0 %v1663
    %2262 = vmatpush1.bf16.msra.mxu0 %v1662
    %2263 = vmatprep.subr.bf16.mxu0 %v1671
    %2264 = vmatpush1.bf16.msra.mxu0 %v1670
    %2265 = vmatprep.subr.bf16.mxu0 %v1679
    %2266 = vmatpush1.bf16.msra.mxu0 %v1678
    %2267 = vmatprep.subr.bf16.mxu0 %v1687
    %2268 = vmatpush1.bf16.msra.mxu0 %v1686
    %2269 = vmatprep.subr.bf16.mxu0 %v1695
    %2270 = vmatpush1.bf16.msra.mxu0 %v1694
    %2271 = vmatprep.mubr.bf16.mxu0 %v373
    %2272 = vmatmul.mubr.bf16.gmra.mrb[0].mxu0 %v372
    %v2273 = vpop.f32.mrb[0].mxu0
    %v2274 = vadd.f32 %v2233, %v2273
    %v2275 = vpop.f32.mrb[0].mxu0
    %v2276 = vadd.f32 %v2235, %v2275
    %v2277 = vpop.f32.mrb[0].mxu0
    %v2278 = vpop.f32.mrb[0].mxu0
    %2279 = vdwg.mxu0
    %v2280 = vmax.f32 %v2028, 0.0
    %v2281 = vmax.f32 %v2030, 0.0
    %v2282 = vmax.f32 %v2110, 0.0
    %v2283 = vmax.f32 %v2112, 0.0
    %v2284 = vmax.f32 %v2192, 0.0
    %v2285 = vmax.f32 %v2194, 0.0
    %v2286 = vmax.f32 %v2274, 0.0
    %v2287 = vmax.f32 %v2276, 0.0
    %v2288 = vpack.c.bf16 %v2280, %v2280
    %v2289 = vpack.c.bf16 %v2281, %v2281
    %v2290 = vpack.c.bf16 %v2282, %v2282
    %v2291 = vpack.c.bf16 %v2283, %v2283
    %v2292 = vpack.c.bf16 %v2284, %v2284
    %v2293 = vpack.c.bf16 %v2285, %v2285
    %v2294 = vpack.c.bf16 %v2286, %v2286
    %v2295 = vpack.c.bf16 %v2287, %v2287
    %v2296 = vld [vmem:[#allocation7] sm:$0xf]
    %v2297 = vld [vmem:[#allocation7 + $0x4] sm:$0xf]
    %v2298 = vld [vmem:[#allocation7 + $0x8] sm:$0xf]
    %v2299 = vld [vmem:[#allocation7 + $0xc] sm:$0xf]
    %v2300 = vld [vmem:[#allocation7 + $0x10] sm:$0xf]
    %v2301 = vld [vmem:[#allocation7 + $0x14] sm:$0xf]
    %v2302 = vld [vmem:[#allocation7 + $0x18] sm:$0xf]
    %v2303 = vld [vmem:[#allocation7 + $0x1c] sm:$0xf]
    %v2304 = vld [vmem:[#allocation7 + $0x20] sm:$0xf]
    %v2305 = vld [vmem:[#allocation7 + $0x24] sm:$0xf]
    %v2306 = vld [vmem:[#allocation7 + $0x28] sm:$0xf]
    %v2307 = vld [vmem:[#allocation7 + $0x2c] sm:$0xf]
    %v2308 = vld [vmem:[#allocation7 + $0x30] sm:$0xf]
    %v2309 = vld [vmem:[#allocation7 + $0x34] sm:$0xf]
    %v2310 = vld [vmem:[#allocation7 + $0x38] sm:$0xf]
    %v2311 = vld [vmem:[#allocation7 + $0x3c] sm:$0xf]
    %v2312 = vld [vmem:[#allocation7 + $0x40] sm:$0xf]
    %v2313 = vld [vmem:[#allocation7 + $0x44] sm:$0xf]
    %v2314 = vld [vmem:[#allocation7 + $0x48] sm:$0xf]
    %v2315 = vld [vmem:[#allocation7 + $0x4c] sm:$0xf]
    %v2316 = vld [vmem:[#allocation7 + $0x50] sm:$0xf]
    %v2317 = vld [vmem:[#allocation7 + $0x54] sm:$0xf]
    %v2318 = vld [vmem:[#allocation7 + $0x58] sm:$0xf]
    %v2319 = vld [vmem:[#allocation7 + $0x5c] sm:$0xf]
    %v2320 = vld [vmem:[#allocation7 + $0x60] sm:$0xf]
    %v2321 = vld [vmem:[#allocation7 + $0x64] sm:$0xf]
    %v2322 = vld [vmem:[#allocation7 + $0x68] sm:$0xf]
    %v2323 = vld [vmem:[#allocation7 + $0x6c] sm:$0xf]
    %v2324 = vld [vmem:[#allocation7 + $0x70] sm:$0xf]
    %v2325 = vld [vmem:[#allocation7 + $0x74] sm:$0xf]
    %v2326 = vld [vmem:[#allocation7 + $0x78] sm:$0xf]
    %v2327 = vld [vmem:[#allocation7 + $0x7c] sm:$0xf]
    %v2328 = vld [vmem:[#allocation7 + $0x80] sm:$0xf]
    %v2329 = vld [vmem:[#allocation7 + $0x84] sm:$0xf]
    %v2330 = vld [vmem:[#allocation7 + $0x88] sm:$0xf]
    %v2331 = vld [vmem:[#allocation7 + $0x8c] sm:$0xf]
    %v2332 = vld [vmem:[#allocation7 + $0x90] sm:$0xf]
    %v2333 = vld [vmem:[#allocation7 + $0x94] sm:$0xf]
    %v2334 = vld [vmem:[#allocation7 + $0x98] sm:$0xf]
    %v2335 = vld [vmem:[#allocation7 + $0x9c] sm:$0xf]
    %v2336 = vld [vmem:[#allocation7 + $0xa0] sm:$0xf]
    %v2337 = vld [vmem:[#allocation7 + $0xa4] sm:$0xf]
    %v2338 = vld [vmem:[#allocation7 + $0xa8] sm:$0xf]
    %v2339 = vld [vmem:[#allocation7 + $0xac] sm:$0xf]
    %v2340 = vld [vmem:[#allocation7 + $0xb0] sm:$0xf]
    %v2341 = vld [vmem:[#allocation7 + $0xb4] sm:$0xf]
    %v2342 = vld [vmem:[#allocation7 + $0xb8] sm:$0xf]
    %v2343 = vld [vmem:[#allocation7 + $0xbc] sm:$0xf]
    %v2344 = vld [vmem:[#allocation7 + $0xc0] sm:$0xf]
    %v2345 = vld [vmem:[#allocation7 + $0xc4] sm:$0xf]
    %v2346 = vld [vmem:[#allocation7 + $0xc8] sm:$0xf]
    %v2347 = vld [vmem:[#allocation7 + $0xcc] sm:$0xf]
    %v2348 = vld [vmem:[#allocation7 + $0xd0] sm:$0xf]
    %v2349 = vld [vmem:[#allocation7 + $0xd4] sm:$0xf]
    %v2350 = vld [vmem:[#allocation7 + $0xd8] sm:$0xf]
    %v2351 = vld [vmem:[#allocation7 + $0xdc] sm:$0xf]
    %v2352 = vld [vmem:[#allocation7 + $0xe0] sm:$0xf]
    %v2353 = vld [vmem:[#allocation7 + $0xe4] sm:$0xf]
    %v2354 = vld [vmem:[#allocation7 + $0xe8] sm:$0xf]
    %v2355 = vld [vmem:[#allocation7 + $0xec] sm:$0xf]
    %v2356 = vld [vmem:[#allocation7 + $0xf0] sm:$0xf]
    %v2357 = vld [vmem:[#allocation7 + $0xf4] sm:$0xf]
    %v2358 = vld [vmem:[#allocation7 + $0xf8] sm:$0xf]
    %v2359 = vld [vmem:[#allocation7 + $0xfc] sm:$0xf]
    %v2360 = vld [vmem:[#allocation7 + $0x100] sm:$0xf]
    %v2361 = vld [vmem:[#allocation7 + $0x104] sm:$0xf]
    %v2362 = vld [vmem:[#allocation7 + $0x108] sm:$0xf]
    %v2363 = vld [vmem:[#allocation7 + $0x10c] sm:$0xf]
    %v2364 = vld [vmem:[#allocation7 + $0x110] sm:$0xf]
    %v2365 = vld [vmem:[#allocation7 + $0x114] sm:$0xf]
    %v2366 = vld [vmem:[#allocation7 + $0x118] sm:$0xf]
    %v2367 = vld [vmem:[#allocation7 + $0x11c] sm:$0xf]
    %v2368 = vld [vmem:[#allocation7 + $0x120] sm:$0xf]
    %v2369 = vld [vmem:[#allocation7 + $0x124] sm:$0xf]
    %v2370 = vld [vmem:[#allocation7 + $0x128] sm:$0xf]
    %v2371 = vld [vmem:[#allocation7 + $0x12c] sm:$0xf]
    %v2372 = vld [vmem:[#allocation7 + $0x130] sm:$0xf]
    %v2373 = vld [vmem:[#allocation7 + $0x134] sm:$0xf]
    %v2374 = vld [vmem:[#allocation7 + $0x138] sm:$0xf]
    %v2375 = vld [vmem:[#allocation7 + $0x13c] sm:$0xf]
    %v2376 = vld [vmem:[#allocation7 + $0x140] sm:$0xf]
    %v2377 = vld [vmem:[#allocation7 + $0x144] sm:$0xf]
    %v2378 = vld [vmem:[#allocation7 + $0x148] sm:$0xf]
    %v2379 = vld [vmem:[#allocation7 + $0x14c] sm:$0xf]
    %v2380 = vld [vmem:[#allocation7 + $0x150] sm:$0xf]
    %v2381 = vld [vmem:[#allocation7 + $0x154] sm:$0xf]
    %v2382 = vld [vmem:[#allocation7 + $0x158] sm:$0xf]
    %v2383 = vld [vmem:[#allocation7 + $0x15c] sm:$0xf]
    %v2384 = vld [vmem:[#allocation7 + $0x160] sm:$0xf]
    %v2385 = vld [vmem:[#allocation7 + $0x164] sm:$0xf]
    %v2386 = vld [vmem:[#allocation7 + $0x168] sm:$0xf]
    %v2387 = vld [vmem:[#allocation7 + $0x16c] sm:$0xf]
    %v2388 = vld [vmem:[#allocation7 + $0x170] sm:$0xf]
    %v2389 = vld [vmem:[#allocation7 + $0x174] sm:$0xf]
    %v2390 = vld [vmem:[#allocation7 + $0x178] sm:$0xf]
    %v2391 = vld [vmem:[#allocation7 + $0x17c] sm:$0xf]
    %v2392 = vld [vmem:[#allocation7 + $0x180] sm:$0xf]
    %v2393 = vld [vmem:[#allocation7 + $0x184] sm:$0xf]
    %v2394 = vld [vmem:[#allocation7 + $0x188] sm:$0xf]
    %v2395 = vld [vmem:[#allocation7 + $0x18c] sm:$0xf]
    %v2396 = vld [vmem:[#allocation7 + $0x190] sm:$0xf]
    %v2397 = vld [vmem:[#allocation7 + $0x194] sm:$0xf]
    %v2398 = vld [vmem:[#allocation7 + $0x198] sm:$0xf]
    %v2399 = vld [vmem:[#allocation7 + $0x19c] sm:$0xf]
    %v2400 = vld [vmem:[#allocation7 + $0x1a0] sm:$0xf]
    %v2401 = vld [vmem:[#allocation7 + $0x1a4] sm:$0xf]
    %v2402 = vld [vmem:[#allocation7 + $0x1a8] sm:$0xf]
    %v2403 = vld [vmem:[#allocation7 + $0x1ac] sm:$0xf]
    %v2404 = vld [vmem:[#allocation7 + $0x1b0] sm:$0xf]
    %v2405 = vld [vmem:[#allocation7 + $0x1b4] sm:$0xf]
    %v2406 = vld [vmem:[#allocation7 + $0x1b8] sm:$0xf]
    %v2407 = vld [vmem:[#allocation7 + $0x1bc] sm:$0xf]
    %v2408 = vld [vmem:[#allocation7 + $0x1c0] sm:$0xf]
    %v2409 = vld [vmem:[#allocation7 + $0x1c4] sm:$0xf]
    %v2410 = vld [vmem:[#allocation7 + $0x1c8] sm:$0xf]
    %v2411 = vld [vmem:[#allocation7 + $0x1cc] sm:$0xf]
    %v2412 = vld [vmem:[#allocation7 + $0x1d0] sm:$0xf]
    %v2413 = vld [vmem:[#allocation7 + $0x1d4] sm:$0xf]
    %v2414 = vld [vmem:[#allocation7 + $0x1d8] sm:$0xf]
    %v2415 = vld [vmem:[#allocation7 + $0x1dc] sm:$0xf]
    %v2416 = vld [vmem:[#allocation7 + $0x1e0] sm:$0xf]
    %v2417 = vld [vmem:[#allocation7 + $0x1e4] sm:$0xf]
    %v2418 = vld [vmem:[#allocation7 + $0x1e8] sm:$0xf]
    %v2419 = vld [vmem:[#allocation7 + $0x1ec] sm:$0xf]
    %v2420 = vld [vmem:[#allocation7 + $0x1f0] sm:$0xf]
    %v2421 = vld [vmem:[#allocation7 + $0x1f4] sm:$0xf]
    %v2422 = vld [vmem:[#allocation7 + $0x1f8] sm:$0xf]
    %v2423 = vld [vmem:[#allocation7 + $0x1fc] sm:$0xf]
    %v2424 = vld [vmem:[%s6] sm:$0x1]
    %v2426 = vlaneseq
    %v2427 = vshrl.u32 %v2426, 7
    %v2428 = vsub.s32 0, %v2427
    %v2429 = vrot.slane %v2424, %v2428
    %v2559 = vunpack.c.l.b16 %v2296
    %v2560 = vunpack.c.l.b16 %v2297
    %v2561 = vunpack.c.l.b16 %v2298
    %v2562 = vunpack.c.l.b16 %v2299
    %v2563 = vunpack.c.l.b16 %v2300
    %v2564 = vunpack.c.l.b16 %v2301
    %v2565 = vunpack.c.l.b16 %v2302
    %v2566 = vunpack.c.l.b16 %v2303
    %v2567 = vunpack.c.l.b16 %v2304
    %v2568 = vunpack.c.l.b16 %v2305
    %v2569 = vunpack.c.l.b16 %v2306
    %v2570 = vunpack.c.l.b16 %v2307
    %v2571 = vunpack.c.l.b16 %v2308
    %v2572 = vunpack.c.l.b16 %v2309
    %v2573 = vunpack.c.l.b16 %v2310
    %v2574 = vunpack.c.l.b16 %v2311
    %v2575 = vunpack.c.l.b16 %v2312
    %v2576 = vunpack.c.l.b16 %v2313
    %v2577 = vunpack.c.l.b16 %v2314
    %v2578 = vunpack.c.l.b16 %v2315
    %v2579 = vunpack.c.l.b16 %v2316
    %v2580 = vunpack.c.l.b16 %v2317
    %v2581 = vunpack.c.l.b16 %v2318
    %v2582 = vunpack.c.l.b16 %v2319
    %v2583 = vunpack.c.l.b16 %v2320
    %v2584 = vunpack.c.l.b16 %v2321
    %v2585 = vunpack.c.l.b16 %v2322
    %v2586 = vunpack.c.l.b16 %v2323
    %v2587 = vunpack.c.l.b16 %v2324
    %v2588 = vunpack.c.l.b16 %v2325
    %v2589 = vunpack.c.l.b16 %v2326
    %v2590 = vunpack.c.l.b16 %v2327
    %v2591 = vunpack.c.l.b16 %v2328
    %v2592 = vunpack.c.l.b16 %v2329
    %v2593 = vunpack.c.l.b16 %v2330
    %v2594 = vunpack.c.l.b16 %v2331
    %v2595 = vunpack.c.l.b16 %v2332
    %v2596 = vunpack.c.l.b16 %v2333
    %v2597 = vunpack.c.l.b16 %v2334
    %v2598 = vunpack.c.l.b16 %v2335
    %v2599 = vunpack.c.l.b16 %v2336
    %v2600 = vunpack.c.l.b16 %v2337
    %v2601 = vunpack.c.l.b16 %v2338
    %v2602 = vunpack.c.l.b16 %v2339
    %v2603 = vunpack.c.l.b16 %v2340
    %v2604 = vunpack.c.l.b16 %v2341
    %v2605 = vunpack.c.l.b16 %v2342
    %v2606 = vunpack.c.l.b16 %v2343
    %v2607 = vunpack.c.l.b16 %v2344
    %v2608 = vunpack.c.l.b16 %v2345
    %v2609 = vunpack.c.l.b16 %v2346
    %v2610 = vunpack.c.l.b16 %v2347
    %v2611 = vunpack.c.l.b16 %v2348
    %v2612 = vunpack.c.l.b16 %v2349
    %v2613 = vunpack.c.l.b16 %v2350
    %v2614 = vunpack.c.l.b16 %v2351
    %v2615 = vunpack.c.l.b16 %v2352
    %v2616 = vunpack.c.l.b16 %v2353
    %v2617 = vunpack.c.l.b16 %v2354
    %v2618 = vunpack.c.l.b16 %v2355
    %v2619 = vunpack.c.l.b16 %v2356
    %v2620 = vunpack.c.l.b16 %v2357
    %v2621 = vunpack.c.l.b16 %v2358
    %v2622 = vunpack.c.l.b16 %v2359
    %v2623 = vunpack.c.l.b16 %v2360
    %v2624 = vunpack.c.l.b16 %v2361
    %v2625 = vunpack.c.l.b16 %v2362
    %v2626 = vunpack.c.l.b16 %v2363
    %v2627 = vunpack.c.l.b16 %v2364
    %v2628 = vunpack.c.l.b16 %v2365
    %v2629 = vunpack.c.l.b16 %v2366
    %v2630 = vunpack.c.l.b16 %v2367
    %v2631 = vunpack.c.l.b16 %v2368
    %v2632 = vunpack.c.l.b16 %v2369
    %v2633 = vunpack.c.l.b16 %v2370
    %v2634 = vunpack.c.l.b16 %v2371
    %v2635 = vunpack.c.l.b16 %v2372
    %v2636 = vunpack.c.l.b16 %v2373
    %v2637 = vunpack.c.l.b16 %v2374
    %v2638 = vunpack.c.l.b16 %v2375
    %v2639 = vunpack.c.l.b16 %v2376
    %v2640 = vunpack.c.l.b16 %v2377
    %v2641 = vunpack.c.l.b16 %v2378
    %v2642 = vunpack.c.l.b16 %v2379
    %v2643 = vunpack.c.l.b16 %v2380
    %v2644 = vunpack.c.l.b16 %v2381
    %v2645 = vunpack.c.l.b16 %v2382
    %v2646 = vunpack.c.l.b16 %v2383
    %v2647 = vunpack.c.l.b16 %v2384
    %v2648 = vunpack.c.l.b16 %v2385
    %v2649 = vunpack.c.l.b16 %v2386
    %v2650 = vunpack.c.l.b16 %v2387
    %v2651 = vunpack.c.l.b16 %v2388
    %v2652 = vunpack.c.l.b16 %v2389
    %v2653 = vunpack.c.l.b16 %v2390
    %v2654 = vunpack.c.l.b16 %v2391
    %v2655 = vunpack.c.l.b16 %v2392
    %v2656 = vunpack.c.l.b16 %v2393
    %v2657 = vunpack.c.l.b16 %v2394
    %v2658 = vunpack.c.l.b16 %v2395
    %v2659 = vunpack.c.l.b16 %v2396
    %v2660 = vunpack.c.l.b16 %v2397
    %v2661 = vunpack.c.l.b16 %v2398
    %v2662 = vunpack.c.l.b16 %v2399
    %v2663 = vunpack.c.l.b16 %v2400
    %v2664 = vunpack.c.l.b16 %v2401
    %v2665 = vunpack.c.l.b16 %v2402
    %v2666 = vunpack.c.l.b16 %v2403
    %v2667 = vunpack.c.l.b16 %v2404
    %v2668 = vunpack.c.l.b16 %v2405
    %v2669 = vunpack.c.l.b16 %v2406
    %v2670 = vunpack.c.l.b16 %v2407
    %v2671 = vunpack.c.l.b16 %v2408
    %v2672 = vunpack.c.l.b16 %v2409
    %v2673 = vunpack.c.l.b16 %v2410
    %v2674 = vunpack.c.l.b16 %v2411
    %v2675 = vunpack.c.l.b16 %v2412
    %v2676 = vunpack.c.l.b16 %v2413
    %v2677 = vunpack.c.l.b16 %v2414
    %v2678 = vunpack.c.l.b16 %v2415
    %v2679 = vunpack.c.l.b16 %v2416
    %v2680 = vunpack.c.l.b16 %v2417
    %v2681 = vunpack.c.l.b16 %v2418
    %v2682 = vunpack.c.l.b16 %v2419
    %v2683 = vunpack.c.l.b16 %v2420
    %v2684 = vunpack.c.l.b16 %v2421
    %v2685 = vunpack.c.l.b16 %v2422
    %v2686 = vunpack.c.l.b16 %v2423
    %v2687 = vpack.c.b16 %v2560, %v2559
    %v2688 = vpack.c.b16 %v2562, %v2561
    %v2689 = vpack.c.b16 %v2564, %v2563
    %v2690 = vpack.c.b16 %v2566, %v2565
    %v2691 = vpack.c.b16 %v2568, %v2567
    %v2692 = vpack.c.b16 %v2570, %v2569
    %v2693 = vpack.c.b16 %v2572, %v2571
    %v2694 = vpack.c.b16 %v2574, %v2573
    %v2695 = vpack.c.b16 %v2576, %v2575
    %v2696 = vpack.c.b16 %v2578, %v2577
    %v2697 = vpack.c.b16 %v2580, %v2579
    %v2698 = vpack.c.b16 %v2582, %v2581
    %v2699 = vpack.c.b16 %v2584, %v2583
    %v2700 = vpack.c.b16 %v2586, %v2585
    %v2701 = vpack.c.b16 %v2588, %v2587
    %v2702 = vpack.c.b16 %v2590, %v2589
    %v2703 = vpack.c.b16 %v2592, %v2591
    %v2704 = vpack.c.b16 %v2594, %v2593
    %v2705 = vpack.c.b16 %v2596, %v2595
    %v2706 = vpack.c.b16 %v2598, %v2597
    %v2707 = vpack.c.b16 %v2600, %v2599
    %v2708 = vpack.c.b16 %v2602, %v2601
    %v2709 = vpack.c.b16 %v2604, %v2603
    %v2710 = vpack.c.b16 %v2606, %v2605
    %v2711 = vpack.c.b16 %v2608, %v2607
    %v2712 = vpack.c.b16 %v2610, %v2609
    %v2713 = vpack.c.b16 %v2612, %v2611
    %v2714 = vpack.c.b16 %v2614, %v2613
    %v2715 = vpack.c.b16 %v2616, %v2615
    %v2716 = vpack.c.b16 %v2618, %v2617
    %v2717 = vpack.c.b16 %v2620, %v2619
    %v2718 = vpack.c.b16 %v2622, %v2621
    %v2719 = vpack.c.b16 %v2624, %v2623
    %v2720 = vpack.c.b16 %v2626, %v2625
    %v2721 = vpack.c.b16 %v2628, %v2627
    %v2722 = vpack.c.b16 %v2630, %v2629
    %v2723 = vpack.c.b16 %v2632, %v2631
    %v2724 = vpack.c.b16 %v2634, %v2633
    %v2725 = vpack.c.b16 %v2636, %v2635
    %v2726 = vpack.c.b16 %v2638, %v2637
    %v2727 = vpack.c.b16 %v2640, %v2639
    %v2728 = vpack.c.b16 %v2642, %v2641
    %v2729 = vpack.c.b16 %v2644, %v2643
    %v2730 = vpack.c.b16 %v2646, %v2645
    %v2731 = vpack.c.b16 %v2648, %v2647
    %v2732 = vpack.c.b16 %v2650, %v2649
    %v2733 = vpack.c.b16 %v2652, %v2651
    %v2734 = vpack.c.b16 %v2654, %v2653
    %v2735 = vpack.c.b16 %v2656, %v2655
    %v2736 = vpack.c.b16 %v2658, %v2657
    %v2737 = vpack.c.b16 %v2660, %v2659
    %v2738 = vpack.c.b16 %v2662, %v2661
    %v2739 = vpack.c.b16 %v2664, %v2663
    %v2740 = vpack.c.b16 %v2666, %v2665
    %v2741 = vpack.c.b16 %v2668, %v2667
    %v2742 = vpack.c.b16 %v2670, %v2669
    %v2743 = vpack.c.b16 %v2672, %v2671
    %v2744 = vpack.c.b16 %v2674, %v2673
    %v2745 = vpack.c.b16 %v2676, %v2675
    %v2746 = vpack.c.b16 %v2678, %v2677
    %v2747 = vpack.c.b16 %v2680, %v2679
    %v2748 = vpack.c.b16 %v2682, %v2681
    %v2749 = vpack.c.b16 %v2684, %v2683
    %v2750 = vpack.c.b16 %v2686, %v2685
    %2815 = vmatprep.subr.bf16.mxu0 0
    %2816 = vmatpush1.bf16.msra.mxu0 %v2687
    %2817 = vmatprep.subr.bf16.mxu0 0
    %2818 = vmatpush1.bf16.msra.mxu0 %v2688
    %2819 = vmatprep.subr.bf16.mxu0 0
    %2820 = vmatpush1.bf16.msra.mxu0 %v2689
    %2821 = vmatprep.subr.bf16.mxu0 0
    %2822 = vmatpush1.bf16.msra.mxu0 %v2690
    %2823 = vmatprep.subr.bf16.mxu0 0
    %2824 = vmatpush1.bf16.msra.mxu0 %v2691
    %2825 = vmatprep.subr.bf16.mxu0 0
    %2826 = vmatpush1.bf16.msra.mxu0 %v2692
    %2827 = vmatprep.subr.bf16.mxu0 0
    %2828 = vmatpush1.bf16.msra.mxu0 %v2693
    %2829 = vmatprep.subr.bf16.mxu0 0
    %2830 = vmatpush1.bf16.msra.mxu0 %v2694
    %2831 = vmatprep.subr.bf16.mxu0 0
    %2832 = vmatpush1.bf16.msra.mxu0 %v2695
    %2833 = vmatprep.subr.bf16.mxu0 0
    %2834 = vmatpush1.bf16.msra.mxu0 %v2696
    %2835 = vmatprep.subr.bf16.mxu0 0
    %2836 = vmatpush1.bf16.msra.mxu0 %v2697
    %2837 = vmatprep.subr.bf16.mxu0 0
    %2838 = vmatpush1.bf16.msra.mxu0 %v2698
    %2839 = vmatprep.subr.bf16.mxu0 0
    %2840 = vmatpush1.bf16.msra.mxu0 %v2699
    %2841 = vmatprep.subr.bf16.mxu0 0
    %2842 = vmatpush1.bf16.msra.mxu0 %v2700
    %2843 = vmatprep.subr.bf16.mxu0 0
    %2844 = vmatpush1.bf16.msra.mxu0 %v2701
    %2845 = vmatprep.subr.bf16.mxu0 0
    %2846 = vmatpush1.bf16.msra.mxu0 %v2702
    %2847 = vmatprep.mubr.bf16.mxu0 %v2289
    %2848 = vmatmul.mubr.bf16.gmra.mrb[0].mxu0 %v2288
    %v2849 = vpop.f32.mrb[0].mxu0
    %v2850 = vadd.f32 %v2429, %v2849
    %v2851 = vpop.f32.mrb[0].mxu0
    %v2852 = vpop.f32.mrb[0].mxu0
    %v2853 = vpop.f32.mrb[0].mxu0
    %2854 = vdwg.mxu0
    %2855 = vmatprep.subr.bf16.mxu0 0
    %2856 = vmatpush1.bf16.msra.mxu0 %v2703
    %2857 = vmatprep.subr.bf16.mxu0 0
    %2858 = vmatpush1.bf16.msra.mxu0 %v2704
    %2859 = vmatprep.subr.bf16.mxu0 0
    %2860 = vmatpush1.bf16.msra.mxu0 %v2705
    %2861 = vmatprep.subr.bf16.mxu0 0
    %2862 = vmatpush1.bf16.msra.mxu0 %v2706
    %2863 = vmatprep.subr.bf16.mxu0 0
    %2864 = vmatpush1.bf16.msra.mxu0 %v2707
    %2865 = vmatprep.subr.bf16.mxu0 0
    %2866 = vmatpush1.bf16.msra.mxu0 %v2708
    %2867 = vmatprep.subr.bf16.mxu0 0
    %2868 = vmatpush1.bf16.msra.mxu0 %v2709
    %2869 = vmatprep.subr.bf16.mxu0 0
    %2870 = vmatpush1.bf16.msra.mxu0 %v2710
    %2871 = vmatprep.subr.bf16.mxu0 0
    %2872 = vmatpush1.bf16.msra.mxu0 %v2711
    %2873 = vmatprep.subr.bf16.mxu0 0
    %2874 = vmatpush1.bf16.msra.mxu0 %v2712
    %2875 = vmatprep.subr.bf16.mxu0 0
    %2876 = vmatpush1.bf16.msra.mxu0 %v2713
    %2877 = vmatprep.subr.bf16.mxu0 0
    %2878 = vmatpush1.bf16.msra.mxu0 %v2714
    %2879 = vmatprep.subr.bf16.mxu0 0
    %2880 = vmatpush1.bf16.msra.mxu0 %v2715
    %2881 = vmatprep.subr.bf16.mxu0 0
    %2882 = vmatpush1.bf16.msra.mxu0 %v2716
    %2883 = vmatprep.subr.bf16.mxu0 0
    %2884 = vmatpush1.bf16.msra.mxu0 %v2717
    %2885 = vmatprep.subr.bf16.mxu0 0
    %2886 = vmatpush1.bf16.msra.mxu0 %v2718
    %2887 = vmatprep.mubr.bf16.mxu0 %v2291
    %2888 = vmatmul.mubr.bf16.gmra.mrb[0].mxu0 %v2290
    %v2889 = vpop.f32.mrb[0].mxu0
    %v2890 = vadd.f32 %v2850, %v2889
    %v2891 = vpop.f32.mrb[0].mxu0
    %v2892 = vpop.f32.mrb[0].mxu0
    %v2893 = vpop.f32.mrb[0].mxu0
    %2894 = vdwg.mxu0
    %2895 = vmatprep.subr.bf16.mxu0 0
    %2896 = vmatpush1.bf16.msra.mxu0 %v2719
    %2897 = vmatprep.subr.bf16.mxu0 0
    %2898 = vmatpush1.bf16.msra.mxu0 %v2720
    %2899 = vmatprep.subr.bf16.mxu0 0
    %2900 = vmatpush1.bf16.msra.mxu0 %v2721
    %2901 = vmatprep.subr.bf16.mxu0 0
    %2902 = vmatpush1.bf16.msra.mxu0 %v2722
    %2903 = vmatprep.subr.bf16.mxu0 0
    %2904 = vmatpush1.bf16.msra.mxu0 %v2723
    %2905 = vmatprep.subr.bf16.mxu0 0
    %2906 = vmatpush1.bf16.msra.mxu0 %v2724
    %2907 = vmatprep.subr.bf16.mxu0 0
    %2908 = vmatpush1.bf16.msra.mxu0 %v2725
    %2909 = vmatprep.subr.bf16.mxu0 0
    %2910 = vmatpush1.bf16.msra.mxu0 %v2726
    %2911 = vmatprep.subr.bf16.mxu0 0
    %2912 = vmatpush1.bf16.msra.mxu0 %v2727
    %2913 = vmatprep.subr.bf16.mxu0 0
    %2914 = vmatpush1.bf16.msra.mxu0 %v2728
    %2915 = vmatprep.subr.bf16.mxu0 0
    %2916 = vmatpush1.bf16.msra.mxu0 %v2729
    %2917 = vmatprep.subr.bf16.mxu0 0
    %2918 = vmatpush1.bf16.msra.mxu0 %v2730
    %2919 = vmatprep.subr.bf16.mxu0 0
    %2920 = vmatpush1.bf16.msra.mxu0 %v2731
    %2921 = vmatprep.subr.bf16.mxu0 0
    %2922 = vmatpush1.bf16.msra.mxu0 %v2732
    %2923 = vmatprep.subr.bf16.mxu0 0
    %2924 = vmatpush1.bf16.msra.mxu0 %v2733
    %2925 = vmatprep.subr.bf16.mxu0 0
    %2926 = vmatpush1.bf16.msra.mxu0 %v2734
    %2927 = vmatprep.mubr.bf16.mxu0 %v2293
    %2928 = vmatmul.mubr.bf16.gmra.mrb[0].mxu0 %v2292
    %v2929 = vpop.f32.mrb[0].mxu0
    %v2930 = vadd.f32 %v2890, %v2929
    %v2931 = vpop.f32.mrb[0].mxu0
    %v2932 = vpop.f32.mrb[0].mxu0
    %v2933 = vpop.f32.mrb[0].mxu0
    %2934 = vdwg.mxu0
    %2935 = vmatprep.subr.bf16.mxu0 0
    %2936 = vmatpush1.bf16.msra.mxu0 %v2735
    %2937 = vmatprep.subr.bf16.mxu0 0
    %2938 = vmatpush1.bf16.msra.mxu0 %v2736
    %2939 = vmatprep.subr.bf16.mxu0 0
    %2940 = vmatpush1.bf16.msra.mxu0 %v2737
    %2941 = vmatprep.subr.bf16.mxu0 0
    %2942 = vmatpush1.bf16.msra.mxu0 %v2738
    %2943 = vmatprep.subr.bf16.mxu0 0
    %2944 = vmatpush1.bf16.msra.mxu0 %v2739
    %2945 = vmatprep.subr.bf16.mxu0 0
    %2946 = vmatpush1.bf16.msra.mxu0 %v2740
    %2947 = vmatprep.subr.bf16.mxu0 0
    %2948 = vmatpush1.bf16.msra.mxu0 %v2741
    %2949 = vmatprep.subr.bf16.mxu0 0
    %2950 = vmatpush1.bf16.msra.mxu0 %v2742
    %2951 = vmatprep.subr.bf16.mxu0 0
    %2952 = vmatpush1.bf16.msra.mxu0 %v2743
    %2953 = vmatprep.subr.bf16.mxu0 0
    %2954 = vmatpush1.bf16.msra.mxu0 %v2744
    %2955 = vmatprep.subr.bf16.mxu0 0
    %2956 = vmatpush1.bf16.msra.mxu0 %v2745
    %2957 = vmatprep.subr.bf16.mxu0 0
    %2958 = vmatpush1.bf16.msra.mxu0 %v2746
    %2959 = vmatprep.subr.bf16.mxu0 0
    %2960 = vmatpush1.bf16.msra.mxu0 %v2747
    %2961 = vmatprep.subr.bf16.mxu0 0
    %2962 = vmatpush1.bf16.msra.mxu0 %v2748
    %2963 = vmatprep.subr.bf16.mxu0 0
    %2964 = vmatpush1.bf16.msra.mxu0 %v2749
    %2965 = vmatprep.subr.bf16.mxu0 0
    %2966 = vmatpush1.bf16.msra.mxu0 %v2750
    %2967 = vmatprep.mubr.bf16.mxu0 %v2295
    %2968 = vmatmul.mubr.bf16.gmra.mrb[0].mxu0 %v2294
    %v2969 = vpop.f32.mrb[0].mxu0
    %v2970 = vadd.f32 %v2930, %v2969
    %v2971 = vpop.f32.mrb[0].mxu0
    %v2972 = vpop.f32.mrb[0].mxu0
    %v2973 = vpop.f32.mrb[0].mxu0
    %2974 = vdwg.mxu0
    %2975 = vmax.xlane.f32.xlu0 %v2970
    %v2976 = vpop.xlane.xlu0 %2975
    %v2977 = vsub.f32 %v2970, %v2976
    %v2978 = vmul.f32 %v2977, 1.442695
    %v2979 = vpow.pop %v2978
    %2980 = vadd.xlane.f32.xlu0 %v2979
    %v2981 = vpop.xlane.xlu0 %2980
    %v2982 = vrcp.pop %v2981
    %v2983 = vmul.f32 %v2979, %v2982
    %2984 = vst [vmem:[#allocation8] sm:$0xff] %v2983
    // Predicated region
    $region42: #{apm_forward.1} parent=1 // pred_check
      _
    $region43: #{apm_forward.1} parent=1 // pred_check_branch
      %2986 = sbr.rel (0) target = $region45
    $region44: #{apm_forward.1} parent=1 // pred_region
      %s2988 = ssub.s32 128, 128
      %2989 = vsyncadd [#allocation4], %s2988
      %s2991 = sshll.u32 [#allocation8], 4
      %s2992 = int_to_ptr.vmem [resolvable:$true] %s2991
      %2994 = dma.vmem_to_hbm [thread:$0]  %s2992, 128, %s7, [#allocation4]
    $region45: #{apm_forward.1} parent=1 // pred_fallthru
      _
    // Predicated region
    $region46: #{apm_forward.1} parent=1 // pred_check
      _
    $region47: #{apm_forward.1} parent=1 // pred_check_branch
      %2996 = sbr.rel (0) target = $region49
    $region48: #{apm_forward.1} parent=1 // pred_region
      %2997 = dma.done [#allocation4], 128
    $region49: #{apm_forward.1} parent=1 // pred_fallthru
      _
    %2998 = vsyncpa [#allocation3], 1
    %2999 = vsyncpa [#allocation6], 1
    %3000 = vsyncpa [#allocation4], 1

</llo_original>
